<compile_context>
chip_gen: v5e
topology: v5e:2x2
jax: 0.10.0
libtpu: 0.0.40
codegen_flags: <defaults>
</compile_context>

<pallas_src>
import functools

import jax
import jax.numpy as jnp
from jax import lax
from jax.experimental import pallas as pl
from jax.experimental.pallas import tpu as pltpu


def _round_up(x, m):
    return ((x + m - 1) // m) * m


# ---------------------------------------------------------------------------
# Kernel 1: fused 3x3 conv (padding=1) + ReLU + 1x1 cls/box heads
#   - im2col in the wrapper -> conv is ONE (tile, 9*Cin) x (9*Cin, Cout) matmul
#   - bf16 operands, f32 accumulation
#   - heads packed into a single lane-dense (tile, 128) output (cls || box || pad)
#   - row-tiled grid with BlockSpec pipelining, "parallel" for megacore
# ---------------------------------------------------------------------------
_HEADW = 128  # 9 (cls) + 36 (box) = 45, padded to a full lane width


def _conv_heads_kernel(p_ref, wconv_ref, bconv_ref, whead_ref, bhead_ref, out_ref):
    feat = jnp.dot(p_ref[...], wconv_ref[...], preferred_element_type=jnp.float32)
    feat = jnp.maximum(feat + bconv_ref[...], 0.0)          # conv + ReLU, f32
    out_ref[...] = (
        jnp.dot(feat.astype(jnp.bfloat16), whead_ref[...],
                preferred_element_type=jnp.float32)
        + bhead_ref[...]
    )


def rpn_conv_heads(x_hwc, params, tile_m=128):
    """x_hwc: (H, W, Cin).  Returns (H*W, 9) cls logits and (H*W, 36) box deltas."""
    H, W, Cin = x_hwc.shape
    Cout = params["w_conv"].shape[-1]
    A = params["w_cls"].shape[-1]
    HW = H * W

    # im2col patches (tap order ky-major, kx, channel) -> one big-K matmul.
    xpad = jnp.pad(x_hwc, ((1, 1), (1, 1), (0, 0)))
    patches = jnp.concatenate(
        [xpad[ky:ky + H, kx:kx + W, :] for ky in range(3) for kx in range(3)],
        axis=-1,
    ).reshape(HW, 9 * Cin).astype(jnp.bfloat16)

    tile_m = min(tile_m, HW)
    HWp = _round_up(HW, tile_m)
    patches = jnp.pad(patches, ((0, HWp - HW), (0, 0)))

    w_conv = params["w_conv"].reshape(9 * Cin, Cout).astype(jnp.bfloat16)
    b_conv = params["b_conv"].reshape(1, Cout).astype(jnp.float32)

    w_head = jnp.zeros((Cout, _HEADW), jnp.bfloat16)
    w_head = w_head.at[:, :A].set(params["w_cls"].astype(jnp.bfloat16))
    w_head = w_head.at[:, A:5 * A].set(params["w_box"].astype(jnp.bfloat16))
    b_head = jnp.zeros((1, _HEADW), jnp.float32)
    b_head = b_head.at[:, :A].set(params["b_cls"].astype(jnp.float32))
    b_head = b_head.at[:, A:5 * A].set(params["b_box"].astype(jnp.float32))

    head = pl.pallas_call(
        _conv_heads_kernel,
        out_shape=jax.ShapeDtypeStruct((HWp, _HEADW), jnp.float32),
        grid=(HWp // tile_m,),
        in_specs=[
            pl.BlockSpec((tile_m, 9 * Cin), lambda i: (i, 0)),
            pl.BlockSpec((9 * Cin, Cout), lambda i: (0, 0)),
            pl.BlockSpec((1, Cout), lambda i: (0, 0)),
            pl.BlockSpec((Cout, _HEADW), lambda i: (0, 0)),
            pl.BlockSpec((1, _HEADW), lambda i: (0, 0)),
        ],
        out_specs=pl.BlockSpec((tile_m, _HEADW), lambda i: (i, 0)),
        compiler_params=pltpu.CompilerParams(dimension_semantics=("parallel",)),
    )(patches, w_conv, b_conv, w_head, b_head)

    return head[:HW, :A], head[:HW, A:5 * A]


# ---------------------------------------------------------------------------
# Kernel 2: box decode + clamp_box_to_image + sigmoid(score), lane-major layout
#   coords on sublanes (4, N), boxes on lanes; image size via SMEM scalars
# ---------------------------------------------------------------------------
def _decode_kernel(hw_ref, p_ref, a_ref, c_ref, box_ref, sc_ref):
    img_h = hw_ref[0].astype(jnp.float32)
    img_w = hw_ref[1].astype(jnp.float32)
    a = a_ref[...]                                   # (4, tile): x1, y1, x2, y2
    w = a[2:3, :] - a[0:1, :]
    h = a[3:4, :] - a[1:2, :]
    cx = a[0:1, :] + 0.5 * w
    cy = a[1:2, :] + 0.5 * h
    p = p_ref[...]                                   # (4, tile): dx, dy, dw, dh
    dx, dy = p[0:1, :], p[1:2, :]
    # overflow guard only (exp(20) is finite); reference does not clamp dw/dh.
    dw = jnp.minimum(p[2:3, :], 20.0)
    dh = jnp.minimum(p[3:4, :], 20.0)
    pcx = w * dx + cx
    pcy = h * dy + cy
    pw = jnp.exp(dw) * w
    ph = jnp.exp(dh) * h
    box_ref[0:1, :] = jnp.clip(pcx - 0.5 * pw, 0.0, img_w)
    box_ref[1:2, :] = jnp.clip(pcy - 0.5 * ph, 0.0, img_h)
    box_ref[2:3, :] = jnp.clip(pcx + 0.5 * pw, 0.0, img_w)
    box_ref[3:4, :] = jnp.clip(pcy + 0.5 * ph, 0.0, img_h)
    sc_ref[...] = jax.nn.sigmoid(c_ref[...])


def decode_clamp_sigmoid(box_pred_t, anchors_t, cls_t, img_h, img_w, tile_n=512):
    """box_pred_t/anchors_t: (4, Na), cls_t: (1, Na) -> ((4, Na) boxes, (Na,) scores)."""
    Na = box_pred_t.shape[1]
    Np = _round_up(Na, tile_n)
    pad = Np - Na
    bp = jnp.pad(box_pred_t, ((0, 0), (0, pad)))
    ap = jnp.pad(anchors_t, ((0, 0), (0, pad)))
    cp = jnp.pad(cls_t, ((0, 0), (0, pad)))
    hw = jnp.array([img_h, img_w], jnp.int32)

    boxes_t, scores = pl.pallas_call(
        _decode_kernel,
        out_shape=(
            jax.ShapeDtypeStruct((4, Np), jnp.float32),
            jax.ShapeDtypeStruct((1, Np), jnp.float32),
        ),
        grid_spec=pltpu.PrefetchScalarGridSpec(
            num_scalar_prefetch=1,
            grid=(Np // tile_n,),
            in_specs=[
                pl.BlockSpec((4, tile_n), lambda i, hw: (0, i)),
                pl.BlockSpec((4, tile_n), lambda i, hw: (0, i)),
                pl.BlockSpec((1, tile_n), lambda i, hw: (0, i)),
            ],
            out_specs=(
                pl.BlockSpec((4, tile_n), lambda i, hw: (0, i)),
                pl.BlockSpec((1, tile_n), lambda i, hw: (0, i)),
            ),
        ),
        compiler_params=pltpu.CompilerParams(dimension_semantics=("parallel",)),
    )(hw, bp, ap, cp)
    return boxes_t[:, :Na], scores[0, :Na]


# ---------------------------------------------------------------------------
# Kernel 3: fused tiled IoU + greedy NMS
#   Boxes are pre-sorted by score (descending).  Grid iterates pivot tiles
#   sequentially; each step (a) suppresses the pivot tile against kept boxes of
#   all earlier tiles via on-the-fly (T,T) IoU blocks, (b) resolves greedy NMS
#   within the tile, (c) writes the tile's keep bits into the resident output.
#   The full K x K IoU matrix is never built.
# ---------------------------------------------------------------------------
def _nms_kernel(nvalid_ref, boxes_nk_ref, pivot_ref, keep_ref, *, thresh):
    t = pl.program_id(0)
    T = pivot_ref.shape[1]
    n_valid = nvalid_ref[0]
    base = t * T
    lane = lax.broadcasted_iota(jnp.int32, (1, T), 1)
    valid = ((base + lane) < n_valid).astype(jnp.float32)

    piv = pivot_ref[...]                               # (4, T): pivot boxes on lanes
    px1, py1 = piv[0:1, :], piv[1:2, :]
    px2, py2 = piv[2:3, :], piv[3:4, :]
    parea = (px2 - px1) * (py2 - py1)                  # (1, T)

    def iou_vs_pivot(b_cols):                          # b_cols: (T, 4) -> (T, T)
        cx1, cy1 = b_cols[:, 0:1], b_cols[:, 1:2]
        cx2, cy2 = b_cols[:, 2:3], b_cols[:, 3:4]
        carea = (cx2 - cx1) * (cy2 - cy1)              # (T, 1)
        xl = jnp.maximum(cx1, px1)
        yt = jnp.maximum(cy1, py1)
        xr = jnp.minimum(cx2, px2)
        yb = jnp.minimum(cy2, py2)
        inter = jnp.maximum(xr - xl, 0.0) * jnp.maximum(yb - yt, 0.0)
        union = carea + parea - inter
        # eps guard: degenerate (zero-area) boxes give IoU 0 -> never suppressed,
        # matching torch's NaN > thresh == False behaviour.
        return inter * pl.reciprocal(jnp.maximum(union, 1e-8), approx=True)

    sub_i = lax.broadcasted_iota(jnp.int32, (T, T), 0)
    lan_j = lax.broadcasted_iota(jnp.int32, (T, T), 1)

    # --- cross-tile suppression by already-finalized earlier tiles ---
    def cross_body(s, suppressed):
        off = pl.multiple_of(s * T, T)
        b_s = boxes_nk_ref[pl.ds(off, T), :]           # (T, 4) earlier boxes (columns)
        kept_s = keep_ref[pl.ds(s, 1), :]              # (1, T) finalized keep bits
        iou_st = iou_vs_pivot(b_s)                     # rows: earlier, cols: pivot
        kept_col = jnp.max(                            # lane->sublane "transpose"
            jnp.where(sub_i == lan_j, jnp.broadcast_to(kept_s, (T, T)), 0.0),
            axis=1, keepdims=True)                     # (T, 1)
        hit = jnp.max(
            jnp.where((iou_st > thresh) & (kept_col > 0.5), 1.0, 0.0),
            axis=0, keepdims=True)                     # (1, T)
        return jnp.maximum(suppressed, hit)

    suppressed = lax.fori_loop(0, t, cross_body, jnp.zeros((1, T), jnp.float32))

    # --- within-tile exact greedy NMS (score order == index order) ---
    b_t = boxes_nk_ref[pl.ds(pl.multiple_of(base, T), T), :]
    iou_tt = iou_vs_pivot(b_t)                         # (T, T)
    alive0 = valid * (1.0 - suppressed)

    def within_body(i, keep_row):
        row = lax.dynamic_slice(iou_tt, (i, 0), (1, T))
        alive_i = jnp.max(jnp.where(lane == i, keep_row, 0.0))
        sup = (row > thresh) & (lane > i) & (alive_i > 0.5)
        return jnp.where(sup, 0.0, keep_row)

    keep_row = lax.fori_loop(0, T, within_body, alive0)
    keep_ref[pl.ds(t, 1), :] = keep_row


def nms_pallas(boxes_n4, nms_thresh, tile=128):
    """boxes_n4: (k, 4) sorted by descending score.  Returns (k,) keep mask {0,1}."""
    k = boxes_n4.shape[0]
    kp = _round_up(max(k, tile), tile)
    boxes_p = jnp.pad(boxes_n4.astype(jnp.float32), ((0, kp - k), (0, 0)))
    boxes_tp = boxes_p.T                               # (4, kp)
    num_tiles = kp // tile
    nvalid = jnp.array([k], jnp.int32)

    keep = pl.pallas_call(
        functools.partial(_nms_kernel, thresh=float(nms_thresh)),
        out_shape=jax.ShapeDtypeStruct((num_tiles, tile), jnp.float32),
        grid_spec=pltpu.PrefetchScalarGridSpec(
            num_scalar_prefetch=1,
            grid=(num_tiles,),
            in_specs=[
                pl.BlockSpec((kp, 4), lambda t, nv: (0, 0)),     # resident, columns
                pl.BlockSpec((4, tile), lambda t, nv: (0, t)),   # pivot tile, rows
            ],
            out_specs=pl.BlockSpec((num_tiles, tile), lambda t, nv: (0, 0)),
        ),
        compiler_params=pltpu.CompilerParams(dimension_semantics=("arbitrary",)),
    )(nvalid, boxes_p, boxes_tp)
    return keep.reshape(-1)[:k]


# ---------------------------------------------------------------------------
# Plain-JAX glue
# ---------------------------------------------------------------------------
def generate_anchors(image_hw, grid_hw, scales, aspect_ratios, dtype=jnp.float32):
    grid_h, grid_w = grid_hw
    image_h, image_w = image_hw
    stride_h = image_h // grid_h
    stride_w = image_w // grid_w
    scale = jnp.asarray(scales, dtype)
    ar = jnp.asarray(aspect_ratios, dtype)
    h_ratio = jnp.sqrt(ar)
    w_ratio = 1.0 / h_ratio
    # intended full (aspect x scale) grid -> 9 anchors/location
    ws = (w_ratio[:, None] * scale[None, :]).reshape(-1)
    hs = (h_ratio[:, None] * scale[None, :]).reshape(-1)
    base = jnp.round(jnp.stack([-ws, -hs, ws, hs], axis=1) / 2.0)
    shift_x = jnp.arange(grid_w, dtype=jnp.int32) * stride_w
    shift_y = jnp.arange(grid_h, dtype=jnp.int32) * stride_h
    sy, sx = jnp.meshgrid(shift_y, shift_x, indexing="ij")
    sx = sx.reshape(-1)
    sy = sy.reshape(-1)
    shifts = jnp.stack([sx, sy, sx, sy], axis=1).astype(dtype)
    anchors = (shifts[:, None, :] + base[None, :, :]).reshape(-1, 4)
    return anchors


def filter_proposals(boxes_t, scores, pre_nms_topk=10000, nms_thresh=0.7,
                     post_nms_topk=2000):
    """boxes_t: (4, Na) clamped boxes; scores: (Na,) sigmoid scores."""
    Na = scores.shape[0]
    k = min(pre_nms_topk, Na)
    top_scores, top_idx = lax.top_k(scores, k)          # descending, like torch.topk
    top_boxes = boxes_t[:, top_idx].T                   # (k, 4) in score order

    keep = nms_pallas(top_boxes, nms_thresh)            # fused IoU + greedy NMS kernel

    # TODO(synk): torchvision.nms returns a dynamic-length index list; JAX needs
    # static shapes, so kept proposals are packed to the front and the tail is
    # zero-padded up to min(post_nms_topk, k).  Downstream code should respect
    # the implied num_keep (== jnp.sum(keep)).
    p = min(post_nms_topk, k)
    order = jnp.argsort(1.0 - keep, stable=True)        # kept first, score order kept
    num_keep = jnp.sum(keep).astype(jnp.int32)
    valid = (jnp.arange(p) < num_keep).astype(top_boxes.dtype)
    proposals = top_boxes[order][:p] * valid[:, None]
    prop_scores = top_scores[order][:p] * valid
    return proposals, prop_scores


def rpn_forward(image, feat_nchw, params, scales=(128, 256, 512),
                aspect_ratios=(0.5, 1.0, 2.0)):
    """Eval-mode RPN forward (target is None)."""
    N, C, H, W = feat_nchw.shape
    assert N == 1, "reference filter_proposals assumes a single image"
    img_h, img_w = image.shape[-2], image.shape[-1]

    x_hwc = jnp.transpose(feat_nchw[0], (1, 2, 0))      # NCHW -> HWC

    # fused conv3x3+ReLU + 1x1 heads (single Pallas kernel, bf16 MXU)
    cls_score, box_pred = rpn_conv_heads(x_hwc, params)  # (HW, 9), (HW, 36)

    anchors = generate_anchors((img_h, img_w), (H, W), scales, aspect_ratios)

    # matches permute(0,2,3,1).reshape(-1,1) and permute(0,3,4,1,2).reshape(-1,4)
    cls_flat = cls_score.reshape(-1)                    # (HW*9,)
    box_flat = box_pred.reshape(-1, 4)                  # (HW*9, 4)

    boxes_t, sig_scores = decode_clamp_sigmoid(
        jnp.transpose(box_flat), jnp.transpose(anchors), cls_flat[None, :],
        img_h, img_w)

    proposals, prop_scores = filter_proposals(boxes_t, sig_scores)

    # TODO(synk): training branch (assign_target_to_anchor) returns None in the
    # reference; only the eval path is implemented.
    return {"proposals": proposals,
            "cls_score": cls_flat.reshape(-1, 1),
            "proposal_scores": prop_scores}


# ---------------------------------------------------------------------------
# Deterministic parameter init + demo run
# ---------------------------------------------------------------------------
if __name__ == "__main__":
    key = jax.random.PRNGKey(0)
    C, H, W = 128, 16, 16        # small stand-in for in_channels=512
    num_anchors = 9
    img_h = img_w = 256          # stride-16 feature map

    ks = jax.random.split(key, 8)
    params = {
        "w_conv": jax.random.normal(ks[0], (3, 3, C, C), jnp.float32) * 0.02,
        "b_conv": jax.random.normal(ks[1], (C,), jnp.float32) * 0.02,
        "w_cls": jax.random.normal(ks[2], (C, num_anchors), jnp.float32) * 0.02,
        "b_cls": jax.random.normal(ks[3], (num_anchors,), jnp.float32) * 0.02,
        "w_box": jax.random.normal(ks[4], (C, num_anchors * 4), jnp.float32) * 0.02,
        "b_box": jax.random.normal(ks[5], (num_anchors * 4,), jnp.float32) * 0.02,
    }

    feat = jax.random.normal(ks[6], (1, C, H, W), jnp.float32)   # NCHW, like PyTorch
    image = jnp.zeros((1, 3, img_h, img_w), jnp.float32)         # only its shape is used

    out = rpn_forward(image, feat, params)
    jax.block_until_ready(out)

    assert out["cls_score"].shape == (H * W * num_anchors, 1)
    assert out["proposals"].shape == (2000, 4)
    print("KERNEL_OK")
</pallas_src>

<mosaic_0001>
module attributes {stable_mosaic.version = 11 : i64} {
  func.func @_conv_heads_kernel(%arg0: i32, %arg1: memref<128x1152xbf16, #tpu.memory_space<vmem>>, %arg2: memref<1152x128xbf16, #tpu.memory_space<vmem>>, %arg3: memref<1x128xf32, #tpu.memory_space<vmem>>, %arg4: memref<128x128xbf16, #tpu.memory_space<vmem>>, %arg5: memref<1x128xf32, #tpu.memory_space<vmem>>, %arg6: memref<128x128xf32, #tpu.memory_space<vmem>>) attributes {dimension_semantics = [#tpu.dimension_semantics<parallel>], iteration_bounds = array<i64: 2>, scalar_prefetch = 0 : i64, scratch_operands = 0 : i64, tpu.core_type = #tpu.core_type<tc>, window_params = [{transform_indices = @transform_0, window_bounds = array<i64: 128, 1152>}, {pipeline_mode = #tpu.pipeline_mode<synchronous>, transform_indices = @transform_1, window_bounds = array<i64: 1152, 128>}, {pipeline_mode = #tpu.pipeline_mode<synchronous>, transform_indices = @transform_2, window_bounds = array<i64: 1, 128>}, {pipeline_mode = #tpu.pipeline_mode<synchronous>, transform_indices = @transform_3, window_bounds = array<i64: 128, 128>}, {pipeline_mode = #tpu.pipeline_mode<synchronous>, transform_indices = @transform_4, window_bounds = array<i64: 1, 128>}, {transform_indices = @transform_5, window_bounds = array<i64: 128, 128>}]} {
    %c0 = arith.constant 0 : index
    %c0_0 = arith.constant 0 : index
    %0 = vector.load %arg1[%c0, %c0_0] : memref<128x1152xbf16, #tpu.memory_space<vmem>>, vector<128x1152xbf16>
    %c0_1 = arith.constant 0 : index
    %c0_2 = arith.constant 0 : index
    %1 = vector.load %arg2[%c0_1, %c0_2] : memref<1152x128xbf16, #tpu.memory_space<vmem>>, vector<1152x128xbf16>
    %cst = arith.constant dense<0.000000e+00> : vector<128x128xf32>
    %2 = tpu.matmul %0, %1, %cst {dimension_numbers = #tpu.dot_dimension_numbers<[1], [0], [0], [1], [0, 0, 1, 1], [], []>} : vector<128x1152xbf16>, vector<1152x128xbf16>, vector<128x128xf32> -> vector<128x128xf32>
    %c0_3 = arith.constant 0 : index
    %c0_4 = arith.constant 0 : index
    %3 = vector.load %arg3[%c0_3, %c0_4] : memref<1x128xf32, #tpu.memory_space<vmem>>, vector<1x128xf32>
    %4 = vector.broadcast %3 : vector<1x128xf32> to vector<128x128xf32>
    %5 = arith.addf %2, %4 : vector<128x128xf32>
    %cst_5 = arith.constant 0.000000e+00 : f32
    %6 = vector.broadcast %cst_5 : f32 to vector<128x128xf32>
    %7 = arith.maximumf %5, %6 : vector<128x128xf32>
    %8 = arith.truncf %7 : vector<128x128xf32> to vector<128x128xbf16>
    %c0_6 = arith.constant 0 : index
    %c0_7 = arith.constant 0 : index
    %9 = vector.load %arg4[%c0_6, %c0_7] : memref<128x128xbf16, #tpu.memory_space<vmem>>, vector<128x128xbf16>
    %cst_8 = arith.constant dense<0.000000e+00> : vector<128x128xf32>
    %10 = tpu.matmul %8, %9, %cst_8 {dimension_numbers = #tpu.dot_dimension_numbers<[1], [0], [0], [1], [0, 0, 1, 1], [], []>} : vector<128x128xbf16>, vector<128x128xbf16>, vector<128x128xf32> -> vector<128x128xf32>
    %c0_9 = arith.constant 0 : index
    %c0_10 = arith.constant 0 : index
    %11 = vector.load %arg5[%c0_9, %c0_10] : memref<1x128xf32, #tpu.memory_space<vmem>>, vector<1x128xf32>
    %12 = vector.broadcast %11 : vector<1x128xf32> to vector<128x128xf32>
    %13 = arith.addf %10, %12 : vector<128x128xf32>
    %c0_11 = arith.constant 0 : index
    %c0_12 = arith.constant 0 : index
    %14 = vector.load %arg6[%c0_11, %c0_12] : memref<128x128xf32, #tpu.memory_space<vmem>>, vector<128x128xf32>
    tpu.vector_store %arg6[%c0_11, %c0_12], %13 {strides = array<i32>} : memref<128x128xf32, #tpu.memory_space<vmem>>, vector<128x128xf32>,
    return
  }
  func.func @transform_0(%arg0: i32) -> (i32, i32) {
    %c0_i32 = arith.constant 0 : i32
    %c0_i32_0 = arith.constant 0 : i32
    return %arg0, %c0_i32 : i32, i32
  }
  func.func @transform_1(%arg0: i32) -> (i32, i32) {
    %c0_i32 = arith.constant 0 : i32
    %c0_i32_0 = arith.constant 0 : i32
    %c0_i32_1 = arith.constant 0 : i32
    return %c0_i32, %c0_i32_0 : i32, i32
  }
  func.func @transform_2(%arg0: i32) -> (i32, i32) {
    %c0_i32 = arith.constant 0 : i32
    %c0_i32_0 = arith.constant 0 : i32
    %c0_i32_1 = arith.constant 0 : i32
    return %c0_i32, %c0_i32_0 : i32, i32
  }
  func.func @transform_3(%arg0: i32) -> (i32, i32) {
    %c0_i32 = arith.constant 0 : i32
    %c0_i32_0 = arith.constant 0 : i32
    %c0_i32_1 = arith.constant 0 : i32
    return %c0_i32, %c0_i32_0 : i32, i32
  }
  func.func @transform_4(%arg0: i32) -> (i32, i32) {
    %c0_i32 = arith.constant 0 : i32
    %c0_i32_0 = arith.constant 0 : i32
    %c0_i32_1 = arith.constant 0 : i32
    return %c0_i32, %c0_i32_0 : i32, i32
  }
  func.func @transform_5(%arg0: i32) -> (i32, i32) {
    %c0_i32 = arith.constant 0 : i32
    %c0_i32_0 = arith.constant 0 : i32
    return %arg0, %c0_i32 : i32, i32
  }
}

</mosaic_0001>

<llo_original>
// kernel: tpu_custom_call.1
$region0: #{tpu_custom_call.1}
  #allocation0 [shape = 'u32[]', space=smem, size = 0x4, offset = 0x4, fixed_abs, tag = 'smem constant byte address 0x4 - core index']
  #allocation1 [shape = 'u32[72,128]{1,0:T(1,128)}', space=vmem, size = 0x9000, scoped, tag = 'internal scratch']
  %s0 = inlined_call_operand.hbm [shape: bf16[256,1152], index: 0, kind: input, shape index: {}]
  %s1 = inlined_call_operand.hbm [shape: bf16[1152,128], index: 1, kind: input, shape index: {}]
  %s2 = inlined_call_operand.vmem [shape: f32[1,128], index: 2, kind: input, shape index: {}]
  %s3 = inlined_call_operand.hbm [shape: bf16[128,128], index: 3, kind: input, shape index: {}]
  %s4 = inlined_call_operand.vmem [shape: f32[1,128], index: 4, kind: input, shape index: {}]
  %s5 = inlined_call_operand.hbm [shape: f32[256,128], index: 5, kind: output, shape index: {}]
  %s6 = sld [smem:[#allocation0]]
  $region65: #{tpu_custom_call.1} parent=0
    _
  %s8 = ssub.s32 1, %s6
  %s9 = scalar_select 0, %s8, %s6
  $region1: #{tpu_custom_call.1} parent=0
    #allocation2 [shape = 'u8[589824]{0}', space=vmem, size = 0x90000, scoped, tag = 'input window, operand 0']
    #allocation3 [shape = 's32[2]{0}', space=sflag, size = 0x8, scoped, tag = 'scoped memory for tpu_custom_call.1']
    #allocation4 [shape = 's32[2]{0}', space=sflag, size = 0x8, scoped, tag = 'scoped memory for tpu_custom_call.1']
    #allocation5 [shape = 'u8[294912]{0}', space=vmem, size = 0x48000, scoped, tag = 'input window, operand 1, single buffered']
    #allocation6 [shape = 's32[1]{0}', space=sflag, size = 0x4, scoped, tag = 'scoped memory for tpu_custom_call.1']
    #allocation7 [shape = 'u8[32768]{0}', space=vmem, size = 0x8000, scoped, tag = 'input window, operand 3, single buffered']
    #allocation8 [shape = 'u8[131072]{0}', space=vmem, size = 0x20000, scoped, tag = 'output window, operand 0']
    %10 = vsyncpa [#allocation3], 0
    %s11 = scalar_lea.sflag [#allocation3], 1
    %12 = vsyncpa %s11, 0
    %13 = vsyncpa [#allocation6], 0
    %14 = vsyncpa [#allocation4], 0
    %s15 = scalar_lea.sflag [#allocation4], 1
    %16 = vsyncpa %s15, 0
    loop: start=0, step=1, limit=4
    $region2: #{tpu_custom_call.1} parent=1 // loop_pre_header
      _
    $region3: #{tpu_custom_call.1} parent=1 // loop_header
      %s18 = sphi 0, %s22
      %p19 = scmp.ge.s32.totalorder %s18, 4
      %s28 = sphi 0, %s30
      %s31 = sphi 0, %s28
      %s32 = sphi 0, %s31
      %s48 = sphi 0, %s32
      %s52 = sphi 0, %s52
      %s54 = sphi 0, %s52
      %s55 = sphi 0, %s54
      %s69 = sphi 0, %s55
      %s73 = sphi 0, %s73
      %s75 = sphi 0, %s73
      %s76 = sphi 0, %s75
      %s90 = sphi 0, %s76
      %s94 = sphi 0, %s94
      %s96 = sphi 0, %s94
      %s97 = sphi 0, %s96
      %s111 = sphi 0, %s97
      %s115 = sphi 0, %s115
      %s117 = sphi 0, %s115
      %s118 = sphi 0, %s117
      %s132 = sphi 0, %s118
      %s138 = sphi 0, %s140
      %s141 = sphi 0, %s138
      %s142 = sphi 0, %s141
      %s158 = sphi 0, %s142
    $region4: #{tpu_custom_call.1} parent=1 // loop_header_branch
      %21 = sbr.rel (%p19) target = $region8
    $region5: #{tpu_custom_call.1} parent=1 // loop_body
      %s23 = ssub.s32 %s18, 1
      %s24 = ssub.s32 %s18, 2
      %s25 = sadd.s32 %s18, 1
      %s26 = ssub.s32 %s18, %s25
      %p27 = scmp.eq.s32.totalorder %s26, 0
      %s29 = sadd.s32 %s28, 1
      %s30 = scalar_select %p27, %s28, %s29
      %p33 = pneg %p27
      %p34 = scmp.eq.s32.totalorder %s18, 1
      %p35 = por %p33, %p34
      %p36 = scmp.ne.s32.totalorder %s28, %s31
      %p37 = scmp.eq.s32.totalorder %s18, 0
      %p38 = por %p36, %p37
      %p39 = scmp.ne.s32.totalorder %s28, %s31
      %p40 = scmp.eq.s32.totalorder %s23, 1
      %p41 = por %p39, %p40
      %p42 = scmp.ne.s32.totalorder %s31, %s32
      %p43 = scmp.eq.s32.totalorder %s23, 0
      %p44 = por %p42, %p43
      %p45 = scmp.ne.s32.totalorder %s31, %s32
      %p46 = scmp.eq.s32.totalorder %s24, 1
      %p47 = por %p45, %p46
      %p49 = scmp.ne.s32.totalorder %s32, %s48
      %p50 = scmp.eq.s32.totalorder %s24, 0
      %p51 = por %p49, %p50
      %s53 = sadd.s32 %s52, 1
      %p56 = scmp.eq.s32.totalorder %s18, 1
      %p57 = scmp.ne.s32.totalorder %s52, %s54
      %p58 = scmp.eq.s32.totalorder %s18, 0
      %p59 = por %p57, %p58
      %p60 = scmp.ne.s32.totalorder %s52, %s54
      %p61 = scmp.eq.s32.totalorder %s23, 1
      %p62 = por %p60, %p61
      %p63 = scmp.ne.s32.totalorder %s54, %s55
      %p64 = scmp.eq.s32.totalorder %s23, 0
      %p65 = por %p63, %p64
      %p66 = scmp.ne.s32.totalorder %s54, %s55
      %p67 = scmp.eq.s32.totalorder %s24, 1
      %p68 = por %p66, %p67
      %p70 = scmp.ne.s32.totalorder %s55, %s69
      %p71 = scmp.eq.s32.totalorder %s24, 0
      %p72 = por %p70, %p71
      %s74 = sadd.s32 %s73, 1
      %p77 = scmp.eq.s32.totalorder %s18, 1
      %p78 = scmp.ne.s32.totalorder %s73, %s75
      %p79 = scmp.eq.s32.totalorder %s18, 0
      %p80 = por %p78, %p79
      %p81 = scmp.ne.s32.totalorder %s73, %s75
      %p82 = scmp.eq.s32.totalorder %s23, 1
      %p83 = por %p81, %p82
      %p84 = scmp.ne.s32.totalorder %s75, %s76
      %p85 = scmp.eq.s32.totalorder %s23, 0
      %p86 = por %p84, %p85
      %p87 = scmp.ne.s32.totalorder %s75, %s76
      %p88 = scmp.eq.s32.totalorder %s24, 1
      %p89 = por %p87, %p88
      %p91 = scmp.ne.s32.totalorder %s76, %s90
      %p92 = scmp.eq.s32.totalorder %s24, 0
      %p93 = por %p91, %p92
      %s95 = sadd.s32 %s94, 1
      %p98 = scmp.eq.s32.totalorder %s18, 1
      %p99 = scmp.ne.s32.totalorder %s94, %s96
      %p100 = scmp.eq.s32.totalorder %s18, 0
      %p101 = por %p99, %p100
      %p102 = scmp.ne.s32.totalorder %s94, %s96
      %p103 = scmp.eq.s32.totalorder %s23, 1
      %p104 = por %p102, %p103
      %p105 = scmp.ne.s32.totalorder %s96, %s97
      %p106 = scmp.eq.s32.totalorder %s23, 0
      %p107 = por %p105, %p106
      %p108 = scmp.ne.s32.totalorder %s96, %s97
      %p109 = scmp.eq.s32.totalorder %s24, 1
      %p110 = por %p108, %p109
      %p112 = scmp.ne.s32.totalorder %s97, %s111
      %p113 = scmp.eq.s32.totalorder %s24, 0
      %p114 = por %p112, %p113
      %s116 = sadd.s32 %s115, 1
      %p119 = scmp.eq.s32.totalorder %s18, 1
      %p120 = scmp.ne.s32.totalorder %s115, %s117
      %p121 = scmp.eq.s32.totalorder %s18, 0
      %p122 = por %p120, %p121
      %p123 = scmp.ne.s32.totalorder %s115, %s117
      %p124 = scmp.eq.s32.totalorder %s23, 1
      %p125 = por %p123, %p124
      %p126 = scmp.ne.s32.totalorder %s117, %s118
      %p127 = scmp.eq.s32.totalorder %s23, 0
      %p128 = por %p126, %p127
      %p129 = scmp.ne.s32.totalorder %s117, %s118
      %p130 = scmp.eq.s32.totalorder %s24, 1
      %p131 = por %p129, %p130
      %p133 = scmp.ne.s32.totalorder %s118, %s132
      %p134 = scmp.eq.s32.totalorder %s24, 0
      %p135 = por %p133, %p134
      %s136 = ssub.s32 %s18, %s25
      %p137 = scmp.eq.s32.totalorder %s136, 0
      %s139 = sadd.s32 %s138, 1
      %s140 = scalar_select %p137, %s138, %s139
      %p143 = pneg %p137
      %p144 = scmp.eq.s32.totalorder %s18, 1
      %p145 = por %p143, %p144
      %p146 = scmp.ne.s32.totalorder %s138, %s141
      %p147 = scmp.eq.s32.totalorder %s18, 0
      %p148 = por %p146, %p147
      %p149 = scmp.ne.s32.totalorder %s138, %s141
      %p150 = scmp.eq.s32.totalorder %s23, 1
      %p151 = por %p149, %p150
      %p152 = scmp.ne.s32.totalorder %s141, %s142
      %p153 = scmp.eq.s32.totalorder %s23, 0
      %p154 = por %p152, %p153
      %p155 = scmp.ne.s32.totalorder %s141, %s142
      %p156 = scmp.eq.s32.totalorder %s24, 1
      %p157 = por %p155, %p156
      %p159 = scmp.ne.s32.totalorder %s142, %s158
      %p160 = scmp.eq.s32.totalorder %s24, 0
      %p161 = por %p159, %p160
      %p162 = scmp.le.s32.totalorder 1, %s18
      %p163 = scmp.lt.s32.totalorder %s18, 3
      %p164 = pnand %p162, %p163
      %p165 = pneg %p164
      // Predicated region
      $region9: #{tpu_custom_call.1} parent=5 // pred_check
        _
      $region10: #{tpu_custom_call.1} parent=5 // pred_check_branch
        %167 = sbr.rel (%p164) target = $region12
      $region11: #{tpu_custom_call.1} parent=5 // pred_region
        %s168 = ssub.s32 %s18, 1
        // Predicated region
        $region13: #{tpu_custom_call.1} parent=11 // pred_check
          %p169 = pneg %p65
        $region14: #{tpu_custom_call.1} parent=11 // pred_check_branch
          %171 = sbr.rel (%p169) target = $region16
        $region15: #{tpu_custom_call.1} parent=11 // pred_region
          %173 = vsyncadd [#allocation6], 0
          %s174 = sshll.u32 %s1, 4
          %s175 = int_to_ptr.hbm [resolvable:$true] %s174
          %s176 = sshll.u32 [#allocation5], 4
          %s177 = int_to_ptr.vmem [resolvable:$true] %s176
          %182 = dma.hbm_to_vmem [thread:$0]  %s175, 9216, %s177, [#allocation6], 64, 64, 4
        $region16: #{tpu_custom_call.1} parent=11 // pred_fallthru
          _
        // Predicated region
        $region17: #{tpu_custom_call.1} parent=11 // pred_check
          %p183 = pneg %p86
        $region18: #{tpu_custom_call.1} parent=11 // pred_check_branch
          %185 = sbr.rel (%p183) target = $region20
        $region19: #{tpu_custom_call.1} parent=11 // pred_region
          _
        $region20: #{tpu_custom_call.1} parent=11 // pred_fallthru
          _
        // Predicated region
        $region21: #{tpu_custom_call.1} parent=11 // pred_check
          %p186 = pneg %p107
        $region22: #{tpu_custom_call.1} parent=11 // pred_check_branch
          %188 = sbr.rel (%p186) target = $region24
        $region23: #{tpu_custom_call.1} parent=11 // pred_region
          %190 = vsyncadd [#allocation6], 0
          %s191 = sshll.u32 %s3, 4
          %s192 = int_to_ptr.hbm [resolvable:$true] %s191
          %s193 = sshll.u32 [#allocation7], 4
          %s194 = int_to_ptr.vmem [resolvable:$true] %s193
          %199 = dma.hbm_to_vmem [thread:$0]  %s192, 1024, %s194, [#allocation6], 64, 64, 4
        $region24: #{tpu_custom_call.1} parent=11 // pred_fallthru
          _
        // Predicated region
        $region25: #{tpu_custom_call.1} parent=11 // pred_check
          %p200 = pneg %p128
        $region26: #{tpu_custom_call.1} parent=11 // pred_check_branch
          %202 = sbr.rel (%p200) target = $region28
        $region27: #{tpu_custom_call.1} parent=11 // pred_region
          _
        $region28: #{tpu_custom_call.1} parent=11 // pred_fallthru
          _
      $region12: #{tpu_custom_call.1} parent=5 // pred_fallthru
        _
      %p203 = scmp.lt.s32.totalorder %s18, 2
      // Predicated region
      $region29: #{tpu_custom_call.1} parent=5 // pred_check
        %p204 = pneg %p203
      $region30: #{tpu_custom_call.1} parent=5 // pred_check_branch
        %206 = sbr.rel (%p204) target = $region32
      $region31: #{tpu_custom_call.1} parent=5 // pred_region
        // Predicated region
        $region33: #{tpu_custom_call.1} parent=31 // pred_check
          %p207 = pneg %p38
        $region34: #{tpu_custom_call.1} parent=31 // pred_check_branch
          %209 = sbr.rel (%p207) target = $region36
        $region35: #{tpu_custom_call.1} parent=31 // pred_region
          %s210 = sand.u32 %s28, 1
          %s211 = scalar_lea.sflag [#allocation3], %s210
          %s212 = sand.u32 %s28, 1
          %s213 = smul.addr %s212, 576
          %s214 = scalar_lea.vmem [#allocation2], %s213
          %s215 = smul.u32 16, %s18
          %217 = vsyncadd %s211, 0
          %s218 = smul.addr %s215, 9
          %s219 = smul.addr %s218, 4
          %s220 = scalar_lea.hbm %s0, %s219
          %s221 = sshll.u32 %s220, 4
          %s222 = int_to_ptr.hbm [resolvable:$true] %s221
          %s223 = sshll.u32 %s214, 4
          %s224 = int_to_ptr.vmem [resolvable:$true] %s223
          %229 = dma.hbm_to_vmem [thread:$0]  %s222, 9216, %s224, %s211, 576, 576, 36
        $region36: #{tpu_custom_call.1} parent=31 // pred_fallthru
          _
      $region32: #{tpu_custom_call.1} parent=5 // pred_fallthru
        _
      %p230 = scmp.le.s32.totalorder 1, %s18
      %p231 = scmp.lt.s32.totalorder %s18, 3
      %p232 = pnand %p230, %p231
      %p233 = pneg %p232
      // Predicated region
      $region37: #{tpu_custom_call.1} parent=5 // pred_check
        _
      $region38: #{tpu_custom_call.1} parent=5 // pred_check_branch
        %235 = sbr.rel (%p232) target = $region40
      $region39: #{tpu_custom_call.1} parent=5 // pred_region
        %s236 = ssub.s32 %s18, 1
        %s237 = sand.u32 %s31, 1
        %s238 = scalar_lea.sflag [#allocation3], %s237
        %s239 = sand.u32 %s31, 1
        %s240 = smul.addr %s239, 576
        %s241 = scalar_lea.vmem [#allocation2], %s240
        // Predicated region
        $region41: #{tpu_custom_call.1} parent=39 // pred_check
          %p242 = pneg %p44
        $region42: #{tpu_custom_call.1} parent=39 // pred_check_branch
          %244 = sbr.rel (%p242) target = $region44
        $region43: #{tpu_custom_call.1} parent=39 // pred_region
          %246 = dma.done %s238, 9216
        $region44: #{tpu_custom_call.1} parent=39 // pred_fallthru
          _
        // Predicated region
        $region45: #{tpu_custom_call.1} parent=39 // pred_check
          %p247 = pneg %p65
        $region46: #{tpu_custom_call.1} parent=39 // pred_check_branch
          %249 = sbr.rel (%p247) target = $region48
        $region47: #{tpu_custom_call.1} parent=39 // pred_region
          %251 = dma.done [#allocation6], 9216
        $region48: #{tpu_custom_call.1} parent=39 // pred_fallthru
          _
        // Predicated region
        $region49: #{tpu_custom_call.1} parent=39 // pred_check
          %p252 = pneg %p107
        $region50: #{tpu_custom_call.1} parent=39 // pred_check_branch
          %254 = sbr.rel (%p252) target = $region52
        $region51: #{tpu_custom_call.1} parent=39 // pred_region
          %256 = dma.done [#allocation6], 1024
        $region52: #{tpu_custom_call.1} parent=39 // pred_fallthru
          _
        %s257 = sand.u32 %s31, 1
        %s258 = scalar_lea.sflag [#allocation3], %s257
        %s259 = sand.u32 %s31, 1
        %s260 = smul.addr %s259, 576
        %s261 = scalar_lea.vmem [#allocation2], %s260
        %p262 = pneg %p44
        %p263 = pneg %p41
        %p264 = pneg %p65
        %p265 = pneg %p62
        %p266 = pneg %p86
        %p267 = pneg %p83
        %p268 = pneg %p107
        %p269 = pneg %p104
        %p270 = pneg %p128
        %p271 = pneg %p125
        %p272 = pneg %p154
        %p273 = pneg %p151
        %s274 = sand.u32 %s141, 1
        %s275 = scalar_lea.sflag [#allocation4], %s274
        %s276 = sand.u32 %s141, 1
        %s277 = smul.addr %s276, 128
        %s278 = scalar_lea.vmem [#allocation8], %s277
        %s279 = smul.u32 16, %s23
        %s280 = smul.u32 16, %s23
        %v281 = vld [vmem:[%s241] sm:$0xff]
        %v282 = vld [vmem:[%s241 + $0x8] sm:$0xff]
        %v283 = vld [vmem:[%s241 + $0x10] sm:$0xff]
        %v284 = vld [vmem:[%s241 + $0x18] sm:$0xff]
        %v285 = vld [vmem:[%s241 + $0x20] sm:$0xf]
        %v286 = vld [vmem:[%s241 + $0x24] sm:$0xff]
        %v287 = vld [vmem:[%s241 + $0x2c] sm:$0xff]
        %v288 = vld [vmem:[%s241 + $0x34] sm:$0xff]
        %v289 = vld [vmem:[%s241 + $0x3c] sm:$0xff]
        %v290 = vld [vmem:[%s241 + $0x44] sm:$0xf]
        %v291 = vld [vmem:[%s241 + $0x48] sm:$0xff]
        %v292 = vld [vmem:[%s241 + $0x50] sm:$0xff]
        %v293 = vld [vmem:[%s241 + $0x58] sm:$0xff]
        %v294 = vld [vmem:[%s241 + $0x60] sm:$0xff]
        %v295 = vld [vmem:[%s241 + $0x68] sm:$0xf]
        %v296 = vld [vmem:[%s241 + $0x6c] sm:$0xff]
        %v297 = vld [vmem:[%s241 + $0x74] sm:$0xff]
        %v298 = vld [vmem:[%s241 + $0x7c] sm:$0xff]
        %v299 = vld [vmem:[%s241 + $0x84] sm:$0xff]
        %v300 = vld [vmem:[%s241 + $0x8c] sm:$0xf]
        %v301 = vld [vmem:[%s241 + $0x90] sm:$0xff]
        %v302 = vld [vmem:[%s241 + $0x98] sm:$0xff]
        %v303 = vld [vmem:[%s241 + $0xa0] sm:$0xff]
        %v304 = vld [vmem:[%s241 + $0xa8] sm:$0xff]
        %v305 = vld [vmem:[%s241 + $0xb0] sm:$0xf]
        %v306 = vld [vmem:[%s241 + $0xb4] sm:$0xff]
        %v307 = vld [vmem:[%s241 + $0xbc] sm:$0xff]
        %v308 = vld [vmem:[%s241 + $0xc4] sm:$0xff]
        %v309 = vld [vmem:[%s241 + $0xcc] sm:$0xff]
        %v310 = vld [vmem:[%s241 + $0xd4] sm:$0xf]
        %v311 = vld [vmem:[%s241 + $0xd8] sm:$0xff]
        %v312 = vld [vmem:[%s241 + $0xe0] sm:$0xff]
        %v313 = vld [vmem:[%s241 + $0xe8] sm:$0xff]
        %v314 = vld [vmem:[%s241 + $0xf0] sm:$0xff]
        %v315 = vld [vmem:[%s241 + $0xf8] sm:$0xf]
        %v316 = vld [vmem:[%s241 + $0xfc] sm:$0xff]
        %v317 = vld [vmem:[%s241 + $0x104] sm:$0xff]
        %v318 = vld [vmem:[%s241 + $0x10c] sm:$0xff]
        %v319 = vld [vmem:[%s241 + $0x114] sm:$0xff]
        %v320 = vld [vmem:[%s241 + $0x11c] sm:$0xf]
        %v321 = vld [vmem:[%s241 + $0x120] sm:$0xff]
        %v322 = vld [vmem:[%s241 + $0x128] sm:$0xff]
        %v323 = vld [vmem:[%s241 + $0x130] sm:$0xff]
        %v324 = vld [vmem:[%s241 + $0x138] sm:$0xff]
        %v325 = vld [vmem:[%s241 + $0x140] sm:$0xf]
        %v326 = vld [vmem:[%s241 + $0x144] sm:$0xff]
        %v327 = vld [vmem:[%s241 + $0x14c] sm:$0xff]
        %v328 = vld [vmem:[%s241 + $0x154] sm:$0xff]
        %v329 = vld [vmem:[%s241 + $0x15c] sm:$0xff]
        %v330 = vld [vmem:[%s241 + $0x164] sm:$0xf]
        %v331 = vld [vmem:[%s241 + $0x168] sm:$0xff]
        %v332 = vld [vmem:[%s241 + $0x170] sm:$0xff]
        %v333 = vld [vmem:[%s241 + $0x178] sm:$0xff]
        %v334 = vld [vmem:[%s241 + $0x180] sm:$0xff]
        %v335 = vld [vmem:[%s241 + $0x188] sm:$0xf]
        %v336 = vld [vmem:[%s241 + $0x18c] sm:$0xff]
        %v337 = vld [vmem:[%s241 + $0x194] sm:$0xff]
        %v338 = vld [vmem:[%s241 + $0x19c] sm:$0xff]
        %v339 = vld [vmem:[%s241 + $0x1a4] sm:$0xff]
        %v340 = vld [vmem:[%s241 + $0x1ac] sm:$0xf]
        %v341 = vld [vmem:[%s241 + $0x1b0] sm:$0xff]
        %v342 = vld [vmem:[%s241 + $0x1b8] sm:$0xff]
        %v343 = vld [vmem:[%s241 + $0x1c0] sm:$0xff]
        %v344 = vld [vmem:[%s241 + $0x1c8] sm:$0xff]
        %v345 = vld [vmem:[%s241 + $0x1d0] sm:$0xf]
        %v346 = vld [vmem:[%s241 + $0x1d4] sm:$0xff]
        %v347 = vld [vmem:[%s241 + $0x1dc] sm:$0xff]
        %v348 = vld [vmem:[%s241 + $0x1e4] sm:$0xff]
        %v349 = vld [vmem:[%s241 + $0x1ec] sm:$0xff]
        %v350 = vld [vmem:[%s241 + $0x1f4] sm:$0xf]
        %v351 = vld [vmem:[%s241 + $0x1f8] sm:$0xff]
        %v352 = vld [vmem:[%s241 + $0x200] sm:$0xff]
        %v353 = vld [vmem:[%s241 + $0x208] sm:$0xff]
        %v354 = vld [vmem:[%s241 + $0x210] sm:$0xff]
        %v355 = vld [vmem:[%s241 + $0x218] sm:$0xf]
        %v356 = vld [vmem:[%s241 + $0x21c] sm:$0xff]
        %v357 = vld [vmem:[%s241 + $0x224] sm:$0xff]
        %v358 = vld [vmem:[%s241 + $0x22c] sm:$0xff]
        %v359 = vld [vmem:[%s241 + $0x234] sm:$0xff]
        %v360 = vld [vmem:[%s241 + $0x23c] sm:$0xf]
        %v361 = vld [vmem:[#allocation5] sm:$0xf]
        %v362 = vld [vmem:[#allocation5 + $0x4] sm:$0xf]
        %v363 = vld [vmem:[#allocation5 + $0x8] sm:$0xf]
        %v364 = vld [vmem:[#allocation5 + $0xc] sm:$0xf]
        %v365 = vld [vmem:[#allocation5 + $0x10] sm:$0xf]
        %v366 = vld [vmem:[#allocation5 + $0x14] sm:$0xf]
        %v367 = vld [vmem:[#allocation5 + $0x18] sm:$0xf]
        %v368 = vld [vmem:[#allocation5 + $0x1c] sm:$0xf]
        %v369 = vld [vmem:[#allocation5 + $0x20] sm:$0xf]
        %v370 = vld [vmem:[#allocation5 + $0x24] sm:$0xf]
        %v371 = vld [vmem:[#allocation5 + $0x28] sm:$0xf]
        %v372 = vld [vmem:[#allocation5 + $0x2c] sm:$0xf]
        %v373 = vld [vmem:[#allocation5 + $0x30] sm:$0xf]
        %v374 = vld [vmem:[#allocation5 + $0x34] sm:$0xf]
        %v375 = vld [vmem:[#allocation5 + $0x38] sm:$0xf]
        %v376 = vld [vmem:[#allocation5 + $0x3c] sm:$0xf]
        %v377 = vld [vmem:[#allocation5 + $0x40] sm:$0xf]
        %v378 = vld [vmem:[#allocation5 + $0x44] sm:$0xf]
        %v379 = vld [vmem:[#allocation5 + $0x48] sm:$0xf]
        %v380 = vld [vmem:[#allocation5 + $0x4c] sm:$0xf]
        %v381 = vld [vmem:[#allocation5 + $0x50] sm:$0xf]
        %v382 = vld [vmem:[#allocation5 + $0x54] sm:$0xf]
        %v383 = vld [vmem:[#allocation5 + $0x58] sm:$0xf]
        %v384 = vld [vmem:[#allocation5 + $0x5c] sm:$0xf]
        %v385 = vld [vmem:[#allocation5 + $0x60] sm:$0xf]
        %v386 = vld [vmem:[#allocation5 + $0x64] sm:$0xf]
        %v387 = vld [vmem:[#allocation5 + $0x68] sm:$0xf]
        %v388 = vld [vmem:[#allocation5 + $0x6c] sm:$0xf]
        %v389 = vld [vmem:[#allocation5 + $0x70] sm:$0xf]
        %v390 = vld [vmem:[#allocation5 + $0x74] sm:$0xf]
        %v391 = vld [vmem:[#allocation5 + $0x78] sm:$0xf]
        %v392 = vld [vmem:[#allocation5 + $0x7c] sm:$0xf]
        %v393 = vld [vmem:[#allocation5 + $0x80] sm:$0xf]
        %v394 = vld [vmem:[#allocation5 + $0x84] sm:$0xf]
        %v395 = vld [vmem:[#allocation5 + $0x88] sm:$0xf]
        %v396 = vld [vmem:[#allocation5 + $0x8c] sm:$0xf]
        %v397 = vld [vmem:[#allocation5 + $0x90] sm:$0xf]
        %v398 = vld [vmem:[#allocation5 + $0x94] sm:$0xf]
        %v399 = vld [vmem:[#allocation5 + $0x98] sm:$0xf]
        %v400 = vld [vmem:[#allocation5 + $0x9c] sm:$0xf]
        %v401 = vld [vmem:[#allocation5 + $0xa0] sm:$0xf]
        %v402 = vld [vmem:[#allocation5 + $0xa4] sm:$0xf]
        %v403 = vld [vmem:[#allocation5 + $0xa8] sm:$0xf]
        %v404 = vld [vmem:[#allocation5 + $0xac] sm:$0xf]
        %v405 = vld [vmem:[#allocation5 + $0xb0] sm:$0xf]
        %v406 = vld [vmem:[#allocation5 + $0xb4] sm:$0xf]
        %v407 = vld [vmem:[#allocation5 + $0xb8] sm:$0xf]
        %v408 = vld [vmem:[#allocation5 + $0xbc] sm:$0xf]
        %v409 = vld [vmem:[#allocation5 + $0xc0] sm:$0xf]
        %v410 = vld [vmem:[#allocation5 + $0xc4] sm:$0xf]
        %v411 = vld [vmem:[#allocation5 + $0xc8] sm:$0xf]
        %v412 = vld [vmem:[#allocation5 + $0xcc] sm:$0xf]
        %v413 = vld [vmem:[#allocation5 + $0xd0] sm:$0xf]
        %v414 = vld [vmem:[#allocation5 + $0xd4] sm:$0xf]
        %v415 = vld [vmem:[#allocation5 + $0xd8] sm:$0xf]
        %v416 = vld [vmem:[#allocation5 + $0xdc] sm:$0xf]
        %v417 = vld [vmem:[#allocation5 + $0xe0] sm:$0xf]
        %v418 = vld [vmem:[#allocation5 + $0xe4] sm:$0xf]
        %v419 = vld [vmem:[#allocation5 + $0xe8] sm:$0xf]
        %v420 = vld [vmem:[#allocation5 + $0xec] sm:$0xf]
        %v421 = vld [vmem:[#allocation5 + $0xf0] sm:$0xf]
        %v422 = vld [vmem:[#allocation5 + $0xf4] sm:$0xf]
        %v423 = vld [vmem:[#allocation5 + $0xf8] sm:$0xf]
        %v424 = vld [vmem:[#allocation5 + $0xfc] sm:$0xf]
        %v425 = vld [vmem:[#allocation5 + $0x100] sm:$0xf]
        %v426 = vld [vmem:[#allocation5 + $0x104] sm:$0xf]
        %v427 = vld [vmem:[#allocation5 + $0x108] sm:$0xf]
        %v428 = vld [vmem:[#allocation5 + $0x10c] sm:$0xf]
        %v429 = vld [vmem:[#allocation5 + $0x110] sm:$0xf]
        %v430 = vld [vmem:[#allocation5 + $0x114] sm:$0xf]
        %v431 = vld [vmem:[#allocation5 + $0x118] sm:$0xf]
        %v432 = vld [vmem:[#allocation5 + $0x11c] sm:$0xf]
        %v433 = vld [vmem:[#allocation5 + $0x120] sm:$0xf]
        %v434 = vld [vmem:[#allocation5 + $0x124] sm:$0xf]
        %v435 = vld [vmem:[#allocation5 + $0x128] sm:$0xf]
        %v436 = vld [vmem:[#allocation5 + $0x12c] sm:$0xf]
        %v437 = vld [vmem:[#allocation5 + $0x130] sm:$0xf]
        %v438 = vld [vmem:[#allocation5 + $0x134] sm:$0xf]
        %v439 = vld [vmem:[#allocation5 + $0x138] sm:$0xf]
        %v440 = vld [vmem:[#allocation5 + $0x13c] sm:$0xf]
        %v441 = vld [vmem:[#allocation5 + $0x140] sm:$0xf]
        %v442 = vld [vmem:[#allocation5 + $0x144] sm:$0xf]
        %v443 = vld [vmem:[#allocation5 + $0x148] sm:$0xf]
        %v444 = vld [vmem:[#allocation5 + $0x14c] sm:$0xf]
        %v445 = vld [vmem:[#allocation5 + $0x150] sm:$0xf]
        %v446 = vld [vmem:[#allocation5 + $0x154] sm:$0xf]
        %v447 = vld [vmem:[#allocation5 + $0x158] sm:$0xf]
        %v448 = vld [vmem:[#allocation5 + $0x15c] sm:$0xf]
        %v449 = vld [vmem:[#allocation5 + $0x160] sm:$0xf]
        %v450 = vld [vmem:[#allocation5 + $0x164] sm:$0xf]
        %v451 = vld [vmem:[#allocation5 + $0x168] sm:$0xf]
        %v452 = vld [vmem:[#allocation5 + $0x16c] sm:$0xf]
        %v453 = vld [vmem:[#allocation5 + $0x170] sm:$0xf]
        %v454 = vld [vmem:[#allocation5 + $0x174] sm:$0xf]
        %v455 = vld [vmem:[#allocation5 + $0x178] sm:$0xf]
        %v456 = vld [vmem:[#allocation5 + $0x17c] sm:$0xf]
        %v457 = vld [vmem:[#allocation5 + $0x180] sm:$0xf]
        %v458 = vld [vmem:[#allocation5 + $0x184] sm:$0xf]
        %v459 = vld [vmem:[#allocation5 + $0x188] sm:$0xf]
        %v460 = vld [vmem:[#allocation5 + $0x18c] sm:$0xf]
        %v461 = vld [vmem:[#allocation5 + $0x190] sm:$0xf]
        %v462 = vld [vmem:[#allocation5 + $0x194] sm:$0xf]
        %v463 = vld [vmem:[#allocation5 + $0x198] sm:$0xf]
        %v464 = vld [vmem:[#allocation5 + $0x19c] sm:$0xf]
        %v465 = vld [vmem:[#allocation5 + $0x1a0] sm:$0xf]
        %v466 = vld [vmem:[#allocation5 + $0x1a4] sm:$0xf]
        %v467 = vld [vmem:[#allocation5 + $0x1a8] sm:$0xf]
        %v468 = vld [vmem:[#allocation5 + $0x1ac] sm:$0xf]
        %v469 = vld [vmem:[#allocation5 + $0x1b0] sm:$0xf]
        %v470 = vld [vmem:[#allocation5 + $0x1b4] sm:$0xf]
        %v471 = vld [vmem:[#allocation5 + $0x1b8] sm:$0xf]
        %v472 = vld [vmem:[#allocation5 + $0x1bc] sm:$0xf]
        %v473 = vld [vmem:[#allocation5 + $0x1c0] sm:$0xf]
        %v474 = vld [vmem:[#allocation5 + $0x1c4] sm:$0xf]
        %v475 = vld [vmem:[#allocation5 + $0x1c8] sm:$0xf]
        %v476 = vld [vmem:[#allocation5 + $0x1cc] sm:$0xf]
        %v477 = vld [vmem:[#allocation5 + $0x1d0] sm:$0xf]
        %v478 = vld [vmem:[#allocation5 + $0x1d4] sm:$0xf]
        %v479 = vld [vmem:[#allocation5 + $0x1d8] sm:$0xf]
        %v480 = vld [vmem:[#allocation5 + $0x1dc] sm:$0xf]
        %v481 = vld [vmem:[#allocation5 + $0x1e0] sm:$0xf]
        %v482 = vld [vmem:[#allocation5 + $0x1e4] sm:$0xf]
        %v483 = vld [vmem:[#allocation5 + $0x1e8] sm:$0xf]
        %v484 = vld [vmem:[#allocation5 + $0x1ec] sm:$0xf]
        %v485 = vld [vmem:[#allocation5 + $0x1f0] sm:$0xf]
        %v486 = vld [vmem:[#allocation5 + $0x1f4] sm:$0xf]
        %v487 = vld [vmem:[#allocation5 + $0x1f8] sm:$0xf]
        %v488 = vld [vmem:[#allocation5 + $0x1fc] sm:$0xf]
        %v489 = vld [vmem:[#allocation5 + $0x200] sm:$0xf]
        %v490 = vld [vmem:[#allocation5 + $0x204] sm:$0xf]
        %v491 = vld [vmem:[#allocation5 + $0x208] sm:$0xf]
        %v492 = vld [vmem:[#allocation5 + $0x20c] sm:$0xf]
        %v493 = vld [vmem:[#allocation5 + $0x210] sm:$0xf]
        %v494 = vld [vmem:[#allocation5 + $0x214] sm:$0xf]
        %v495 = vld [vmem:[#allocation5 + $0x218] sm:$0xf]
        %v496 = vld [vmem:[#allocation5 + $0x21c] sm:$0xf]
        %v497 = vld [vmem:[#allocation5 + $0x220] sm:$0xf]
        %v498 = vld [vmem:[#allocation5 + $0x224] sm:$0xf]
        %v499 = vld [vmem:[#allocation5 + $0x228] sm:$0xf]
        %v500 = vld [vmem:[#allocation5 + $0x22c] sm:$0xf]
        %v501 = vld [vmem:[#allocation5 + $0x230] sm:$0xf]
        %v502 = vld [vmem:[#allocation5 + $0x234] sm:$0xf]
        %v503 = vld [vmem:[#allocation5 + $0x238] sm:$0xf]
        %v504 = vld [vmem:[#allocation5 + $0x23c] sm:$0xf]
        %v505 = vld [vmem:[%s2] sm:$0x1]
        %v507 = vperm.slane %v505, 0
        %v589 = vunpack.c.l.b16 %v281
        %v590 = vunpack.c.h.b16 %v281
        %v591 = vunpack.c.l.b16 %v282
        %v592 = vunpack.c.h.b16 %v282
        %v593 = vunpack.c.l.b16 %v283
        %v594 = vunpack.c.h.b16 %v283
        %v595 = vunpack.c.l.b16 %v284
        %v596 = vunpack.c.h.b16 %v284
        %v597 = vunpack.c.l.b16 %v285
        %v598 = vunpack.c.l.b16 %v286
        %v599 = vunpack.c.h.b16 %v286
        %v600 = vunpack.c.l.b16 %v287
        %v601 = vunpack.c.h.b16 %v287
        %v602 = vunpack.c.l.b16 %v288
        %v603 = vunpack.c.h.b16 %v288
        %v604 = vunpack.c.l.b16 %v289
        %v605 = vunpack.c.h.b16 %v289
        %v606 = vunpack.c.l.b16 %v290
        %v607 = vunpack.c.l.b16 %v291
        %v608 = vunpack.c.h.b16 %v291
        %v609 = vunpack.c.l.b16 %v292
        %v610 = vunpack.c.h.b16 %v292
        %v611 = vunpack.c.l.b16 %v293
        %v612 = vunpack.c.h.b16 %v293
        %v613 = vunpack.c.l.b16 %v294
        %v614 = vunpack.c.h.b16 %v294
        %v615 = vunpack.c.l.b16 %v295
        %v616 = vunpack.c.l.b16 %v296
        %v617 = vunpack.c.h.b16 %v296
        %v618 = vunpack.c.l.b16 %v297
        %v619 = vunpack.c.h.b16 %v297
        %v620 = vunpack.c.l.b16 %v298
        %v621 = vunpack.c.h.b16 %v298
        %v622 = vunpack.c.l.b16 %v299
        %v623 = vunpack.c.h.b16 %v299
        %v624 = vunpack.c.l.b16 %v300
        %v625 = vunpack.c.l.b16 %v301
        %v626 = vunpack.c.h.b16 %v301
        %v627 = vunpack.c.l.b16 %v302
        %v628 = vunpack.c.h.b16 %v302
        %v629 = vunpack.c.l.b16 %v303
        %v630 = vunpack.c.h.b16 %v303
        %v631 = vunpack.c.l.b16 %v304
        %v632 = vunpack.c.h.b16 %v304
        %v633 = vunpack.c.l.b16 %v305
        %v634 = vunpack.c.l.b16 %v306
        %v635 = vunpack.c.h.b16 %v306
        %v636 = vunpack.c.l.b16 %v307
        %v637 = vunpack.c.h.b16 %v307
        %v638 = vunpack.c.l.b16 %v308
        %v639 = vunpack.c.h.b16 %v308
        %v640 = vunpack.c.l.b16 %v309
        %v641 = vunpack.c.h.b16 %v309
        %v642 = vunpack.c.l.b16 %v310
        %v643 = vunpack.c.l.b16 %v311
        %v644 = vunpack.c.h.b16 %v311
        %v645 = vunpack.c.l.b16 %v312
        %v646 = vunpack.c.h.b16 %v312
        %v647 = vunpack.c.l.b16 %v313
        %v648 = vunpack.c.h.b16 %v313
        %v649 = vunpack.c.l.b16 %v314
        %v650 = vunpack.c.h.b16 %v314
        %v651 = vunpack.c.l.b16 %v315
        %v652 = vunpack.c.l.b16 %v316
        %v653 = vunpack.c.h.b16 %v316
        %v654 = vunpack.c.l.b16 %v317
        %v655 = vunpack.c.h.b16 %v317
        %v656 = vunpack.c.l.b16 %v318
        %v657 = vunpack.c.h.b16 %v318
        %v658 = vunpack.c.l.b16 %v319
        %v659 = vunpack.c.h.b16 %v319
        %v660 = vunpack.c.l.b16 %v320
        %v661 = vunpack.c.l.b16 %v321
        %v662 = vunpack.c.h.b16 %v321
        %v663 = vunpack.c.l.b16 %v322
        %v664 = vunpack.c.h.b16 %v322
        %v665 = vunpack.c.l.b16 %v323
        %v666 = vunpack.c.h.b16 %v323
        %v667 = vunpack.c.l.b16 %v324
        %v668 = vunpack.c.h.b16 %v324
        %v669 = vunpack.c.l.b16 %v325
        %v670 = vunpack.c.l.b16 %v326
        %v671 = vunpack.c.h.b16 %v326
        %v672 = vunpack.c.l.b16 %v327
        %v673 = vunpack.c.h.b16 %v327
        %v674 = vunpack.c.l.b16 %v328
        %v675 = vunpack.c.h.b16 %v328
        %v676 = vunpack.c.l.b16 %v329
        %v677 = vunpack.c.h.b16 %v329
        %v678 = vunpack.c.l.b16 %v330
        %v679 = vunpack.c.l.b16 %v331
        %v680 = vunpack.c.h.b16 %v331
        %v681 = vunpack.c.l.b16 %v332
        %v682 = vunpack.c.h.b16 %v332
        %v683 = vunpack.c.l.b16 %v333
        %v684 = vunpack.c.h.b16 %v333
        %v685 = vunpack.c.l.b16 %v334
        %v686 = vunpack.c.h.b16 %v334
        %v687 = vunpack.c.l.b16 %v335
        %v688 = vunpack.c.l.b16 %v336
        %v689 = vunpack.c.h.b16 %v336
        %v690 = vunpack.c.l.b16 %v337
        %v691 = vunpack.c.h.b16 %v337
        %v692 = vunpack.c.l.b16 %v338
        %v693 = vunpack.c.h.b16 %v338
        %v694 = vunpack.c.l.b16 %v339
        %v695 = vunpack.c.h.b16 %v339
        %v696 = vunpack.c.l.b16 %v340
        %v697 = vunpack.c.l.b16 %v341
        %v698 = vunpack.c.h.b16 %v341
        %v699 = vunpack.c.l.b16 %v342
        %v700 = vunpack.c.h.b16 %v342
        %v701 = vunpack.c.l.b16 %v343
        %v702 = vunpack.c.h.b16 %v343
        %v703 = vunpack.c.l.b16 %v344
        %v704 = vunpack.c.h.b16 %v344
        %v705 = vunpack.c.l.b16 %v345
        %v706 = vunpack.c.l.b16 %v346
        %v707 = vunpack.c.h.b16 %v346
        %v708 = vunpack.c.l.b16 %v347
        %v709 = vunpack.c.h.b16 %v347
        %v710 = vunpack.c.l.b16 %v348
        %v711 = vunpack.c.h.b16 %v348
        %v712 = vunpack.c.l.b16 %v349
        %v713 = vunpack.c.h.b16 %v349
        %v714 = vunpack.c.l.b16 %v350
        %v715 = vunpack.c.l.b16 %v351
        %v716 = vunpack.c.h.b16 %v351
        %v717 = vunpack.c.l.b16 %v352
        %v718 = vunpack.c.h.b16 %v352
        %v719 = vunpack.c.l.b16 %v353
        %v720 = vunpack.c.h.b16 %v353
        %v721 = vunpack.c.l.b16 %v354
        %v722 = vunpack.c.h.b16 %v354
        %v723 = vunpack.c.l.b16 %v355
        %v724 = vunpack.c.l.b16 %v356
        %v725 = vunpack.c.h.b16 %v356
        %v726 = vunpack.c.l.b16 %v357
        %v727 = vunpack.c.h.b16 %v357
        %v728 = vunpack.c.l.b16 %v358
        %v729 = vunpack.c.h.b16 %v358
        %v730 = vunpack.c.l.b16 %v359
        %v731 = vunpack.c.h.b16 %v359
        %v732 = vunpack.c.l.b16 %v360
        %v733 = vpack.c.b16 %v598, %v589
        %v734 = vpack.c.b16 %v599, %v590
        %v735 = vpack.c.b16 %v600, %v591
        %v736 = vpack.c.b16 %v601, %v592
        %v737 = vpack.c.b16 %v602, %v593
        %v738 = vpack.c.b16 %v603, %v594
        %v739 = vpack.c.b16 %v604, %v595
        %v740 = vpack.c.b16 %v605, %v596
        %v741 = vpack.c.b16 %v606, %v597
        %v742 = vpack.c.b16 %v616, %v607
        %v743 = vpack.c.b16 %v617, %v608
        %v744 = vpack.c.b16 %v618, %v609
        %v745 = vpack.c.b16 %v619, %v610
        %v746 = vpack.c.b16 %v620, %v611
        %v747 = vpack.c.b16 %v621, %v612
        %v748 = vpack.c.b16 %v622, %v613
        %v749 = vpack.c.b16 %v623, %v614
        %v750 = vpack.c.b16 %v624, %v615
        %v751 = vpack.c.b16 %v634, %v625
        %v752 = vpack.c.b16 %v635, %v626
        %v753 = vpack.c.b16 %v636, %v627
        %v754 = vpack.c.b16 %v637, %v628
        %v755 = vpack.c.b16 %v638, %v629
        %v756 = vpack.c.b16 %v639, %v630
        %v757 = vpack.c.b16 %v640, %v631
        %v758 = vpack.c.b16 %v641, %v632
        %v759 = vpack.c.b16 %v642, %v633
        %v760 = vpack.c.b16 %v652, %v643
        %v761 = vpack.c.b16 %v653, %v644
        %v762 = vpack.c.b16 %v654, %v645
        %v763 = vpack.c.b16 %v655, %v646
        %v764 = vpack.c.b16 %v656, %v647
        %v765 = vpack.c.b16 %v657, %v648
        %v766 = vpack.c.b16 %v658, %v649
        %v767 = vpack.c.b16 %v659, %v650
        %v768 = vpack.c.b16 %v660, %v651
        %v769 = vpack.c.b16 %v670, %v661
        %v770 = vpack.c.b16 %v671, %v662
        %v771 = vpack.c.b16 %v672, %v663
        %v772 = vpack.c.b16 %v673, %v664
        %v773 = vpack.c.b16 %v674, %v665
        %v774 = vpack.c.b16 %v675, %v666
        %v775 = vpack.c.b16 %v676, %v667
        %v776 = vpack.c.b16 %v677, %v668
        %v777 = vpack.c.b16 %v678, %v669
        %v778 = vpack.c.b16 %v688, %v679
        %v779 = vpack.c.b16 %v689, %v680
        %v780 = vpack.c.b16 %v690, %v681
        %v781 = vpack.c.b16 %v691, %v682
        %v782 = vpack.c.b16 %v692, %v683
        %v783 = vpack.c.b16 %v693, %v684
        %v784 = vpack.c.b16 %v694, %v685
        %v785 = vpack.c.b16 %v695, %v686
        %v786 = vpack.c.b16 %v696, %v687
        %v787 = vpack.c.b16 %v706, %v697
        %v788 = vpack.c.b16 %v707, %v698
        %v789 = vpack.c.b16 %v708, %v699
        %v790 = vpack.c.b16 %v709, %v700
        %v791 = vpack.c.b16 %v710, %v701
        %v792 = vpack.c.b16 %v711, %v702
        %v793 = vpack.c.b16 %v712, %v703
        %v794 = vpack.c.b16 %v713, %v704
        %v795 = vpack.c.b16 %v714, %v705
        %v796 = vpack.c.b16 %v724, %v715
        %v797 = vpack.c.b16 %v725, %v716
        %v798 = vpack.c.b16 %v726, %v717
        %v799 = vpack.c.b16 %v727, %v718
        %v800 = vpack.c.b16 %v728, %v719
        %v801 = vpack.c.b16 %v729, %v720
        %v802 = vpack.c.b16 %v730, %v721
        %v803 = vpack.c.b16 %v731, %v722
        %v804 = vpack.c.b16 %v732, %v723
        %v1021 = vunpack.c.l.b16 %v361
        %v1022 = vunpack.c.l.b16 %v362
        %v1023 = vunpack.c.l.b16 %v363
        %v1024 = vunpack.c.l.b16 %v364
        %v1025 = vunpack.c.l.b16 %v365
        %v1026 = vunpack.c.l.b16 %v366
        %v1027 = vunpack.c.l.b16 %v367
        %v1028 = vunpack.c.l.b16 %v368
        %v1029 = vunpack.c.l.b16 %v369
        %v1030 = vunpack.c.l.b16 %v370
        %v1031 = vunpack.c.l.b16 %v371
        %v1032 = vunpack.c.l.b16 %v372
        %v1033 = vunpack.c.l.b16 %v373
        %v1034 = vunpack.c.l.b16 %v374
        %v1035 = vunpack.c.l.b16 %v375
        %v1036 = vunpack.c.l.b16 %v376
        %v1037 = vunpack.c.l.b16 %v377
        %v1038 = vunpack.c.l.b16 %v378
        %v1039 = vunpack.c.l.b16 %v379
        %v1040 = vunpack.c.l.b16 %v380
        %v1041 = vunpack.c.l.b16 %v381
        %v1042 = vunpack.c.l.b16 %v382
        %v1043 = vunpack.c.l.b16 %v383
        %v1044 = vunpack.c.l.b16 %v384
        %v1045 = vunpack.c.l.b16 %v385
        %v1046 = vunpack.c.l.b16 %v386
        %v1047 = vunpack.c.l.b16 %v387
        %v1048 = vunpack.c.l.b16 %v388
        %v1049 = vunpack.c.l.b16 %v389
        %v1050 = vunpack.c.l.b16 %v390
        %v1051 = vunpack.c.l.b16 %v391
        %v1052 = vunpack.c.l.b16 %v392
        %v1053 = vunpack.c.l.b16 %v393
        %v1054 = vunpack.c.l.b16 %v394
        %v1055 = vunpack.c.l.b16 %v395
        %v1056 = vunpack.c.l.b16 %v396
        %v1057 = vunpack.c.l.b16 %v397
        %v1058 = vunpack.c.l.b16 %v398
        %v1059 = vunpack.c.l.b16 %v399
        %v1060 = vunpack.c.l.b16 %v400
        %v1061 = vunpack.c.l.b16 %v401
        %v1062 = vunpack.c.l.b16 %v402
        %v1063 = vunpack.c.l.b16 %v403
        %v1064 = vunpack.c.l.b16 %v404
        %v1065 = vunpack.c.l.b16 %v405
        %v1066 = vunpack.c.l.b16 %v406
        %v1067 = vunpack.c.l.b16 %v407
        %v1068 = vunpack.c.l.b16 %v408
        %v1069 = vunpack.c.l.b16 %v409
        %v1070 = vunpack.c.l.b16 %v410
        %v1071 = vunpack.c.l.b16 %v411
        %v1072 = vunpack.c.l.b16 %v412
        %v1073 = vunpack.c.l.b16 %v413
        %v1074 = vunpack.c.l.b16 %v414
        %v1075 = vunpack.c.l.b16 %v415
        %v1076 = vunpack.c.l.b16 %v416
        %v1077 = vunpack.c.l.b16 %v417
        %v1078 = vunpack.c.l.b16 %v418
        %v1079 = vunpack.c.l.b16 %v419
        %v1080 = vunpack.c.l.b16 %v420
        %v1081 = vunpack.c.l.b16 %v421
        %v1082 = vunpack.c.l.b16 %v422
        %v1083 = vunpack.c.l.b16 %v423
        %v1084 = vunpack.c.l.b16 %v424
        %v1085 = vunpack.c.l.b16 %v425
        %v1086 = vunpack.c.l.b16 %v426
        %v1087 = vunpack.c.l.b16 %v427
        %v1088 = vunpack.c.l.b16 %v428
        %v1089 = vunpack.c.l.b16 %v429
        %v1090 = vunpack.c.l.b16 %v430
        %v1091 = vunpack.c.l.b16 %v431
        %v1092 = vunpack.c.l.b16 %v432
        %v1093 = vunpack.c.l.b16 %v433
        %v1094 = vunpack.c.l.b16 %v434
        %v1095 = vunpack.c.l.b16 %v435
        %v1096 = vunpack.c.l.b16 %v436
        %v1097 = vunpack.c.l.b16 %v437
        %v1098 = vunpack.c.l.b16 %v438
        %v1099 = vunpack.c.l.b16 %v439
        %v1100 = vunpack.c.l.b16 %v440
        %v1101 = vunpack.c.l.b16 %v441
        %v1102 = vunpack.c.l.b16 %v442
        %v1103 = vunpack.c.l.b16 %v443
        %v1104 = vunpack.c.l.b16 %v444
        %v1105 = vunpack.c.l.b16 %v445
        %v1106 = vunpack.c.l.b16 %v446
        %v1107 = vunpack.c.l.b16 %v447
        %v1108 = vunpack.c.l.b16 %v448
        %v1109 = vunpack.c.l.b16 %v449
        %v1110 = vunpack.c.l.b16 %v450
        %v1111 = vunpack.c.l.b16 %v451
        %v1112 = vunpack.c.l.b16 %v452
        %v1113 = vunpack.c.l.b16 %v453
        %v1114 = vunpack.c.l.b16 %v454
        %v1115 = vunpack.c.l.b16 %v455
        %v1116 = vunpack.c.l.b16 %v456
        %v1117 = vunpack.c.l.b16 %v457
        %v1118 = vunpack.c.l.b16 %v458
        %v1119 = vunpack.c.l.b16 %v459
        %v1120 = vunpack.c.l.b16 %v460
        %v1121 = vunpack.c.l.b16 %v461
        %v1122 = vunpack.c.l.b16 %v462
        %v1123 = vunpack.c.l.b16 %v463
        %v1124 = vunpack.c.l.b16 %v464
        %v1125 = vunpack.c.l.b16 %v465
        %v1126 = vunpack.c.l.b16 %v466
        %v1127 = vunpack.c.l.b16 %v467
        %v1128 = vunpack.c.l.b16 %v468
        %v1129 = vunpack.c.l.b16 %v469
        %v1130 = vunpack.c.l.b16 %v470
        %v1131 = vunpack.c.l.b16 %v471
        %v1132 = vunpack.c.l.b16 %v472
        %v1133 = vunpack.c.l.b16 %v473
        %v1134 = vunpack.c.l.b16 %v474
        %v1135 = vunpack.c.l.b16 %v475
        %v1136 = vunpack.c.l.b16 %v476
        %v1137 = vunpack.c.l.b16 %v477
        %v1138 = vunpack.c.l.b16 %v478
        %v1139 = vunpack.c.l.b16 %v479
        %v1140 = vunpack.c.l.b16 %v480
        %v1141 = vunpack.c.l.b16 %v481
        %v1142 = vunpack.c.l.b16 %v482
        %v1143 = vunpack.c.l.b16 %v483
        %v1144 = vunpack.c.l.b16 %v484
        %v1145 = vunpack.c.l.b16 %v485
        %v1146 = vunpack.c.l.b16 %v486
        %v1147 = vunpack.c.l.b16 %v487
        %v1148 = vunpack.c.l.b16 %v488
        %v1149 = vunpack.c.l.b16 %v489
        %v1150 = vunpack.c.l.b16 %v490
        %v1151 = vunpack.c.l.b16 %v491
        %v1152 = vunpack.c.l.b16 %v492
        %v1153 = vunpack.c.l.b16 %v493
        %v1154 = vunpack.c.l.b16 %v494
        %v1155 = vunpack.c.l.b16 %v495
        %v1156 = vunpack.c.l.b16 %v496
        %v1157 = vunpack.c.l.b16 %v497
        %v1158 = vunpack.c.l.b16 %v498
        %v1159 = vunpack.c.l.b16 %v499
        %v1160 = vunpack.c.l.b16 %v500
        %v1161 = vunpack.c.l.b16 %v501
        %v1162 = vunpack.c.l.b16 %v502
        %v1163 = vunpack.c.l.b16 %v503
        %v1164 = vunpack.c.l.b16 %v504
        %v1165 = vpack.c.b16 %v1022, %v1021
        %v1166 = vpack.c.b16 %v1024, %v1023
        %v1167 = vpack.c.b16 %v1026, %v1025
        %v1168 = vpack.c.b16 %v1028, %v1027
        %v1169 = vpack.c.b16 %v1030, %v1029
        %v1170 = vpack.c.b16 %v1032, %v1031
        %v1171 = vpack.c.b16 %v1034, %v1033
        %v1172 = vpack.c.b16 %v1036, %v1035
        %v1173 = vpack.c.b16 %v1038, %v1037
        %v1174 = vpack.c.b16 %v1040, %v1039
        %v1175 = vpack.c.b16 %v1042, %v1041
        %v1176 = vpack.c.b16 %v1044, %v1043
        %v1177 = vpack.c.b16 %v1046, %v1045
        %v1178 = vpack.c.b16 %v1048, %v1047
        %v1179 = vpack.c.b16 %v1050, %v1049
        %v1180 = vpack.c.b16 %v1052, %v1051
        %v1181 = vpack.c.b16 %v1054, %v1053
        %v1182 = vpack.c.b16 %v1056, %v1055
        %v1183 = vpack.c.b16 %v1058, %v1057
        %v1184 = vpack.c.b16 %v1060, %v1059
        %v1185 = vpack.c.b16 %v1062, %v1061
        %v1186 = vpack.c.b16 %v1064, %v1063
        %v1187 = vpack.c.b16 %v1066, %v1065
        %v1188 = vpack.c.b16 %v1068, %v1067
        %v1189 = vpack.c.b16 %v1070, %v1069
        %v1190 = vpack.c.b16 %v1072, %v1071
        %v1191 = vpack.c.b16 %v1074, %v1073
        %v1192 = vpack.c.b16 %v1076, %v1075
        %v1193 = vpack.c.b16 %v1078, %v1077
        %v1194 = vpack.c.b16 %v1080, %v1079
        %v1195 = vpack.c.b16 %v1082, %v1081
        %v1196 = vpack.c.b16 %v1084, %v1083
        %v1197 = vpack.c.b16 %v1086, %v1085
        %v1198 = vpack.c.b16 %v1088, %v1087
        %v1199 = vpack.c.b16 %v1090, %v1089
        %v1200 = vpack.c.b16 %v1092, %v1091
        %v1201 = vpack.c.b16 %v1094, %v1093
        %v1202 = vpack.c.b16 %v1096, %v1095
        %v1203 = vpack.c.b16 %v1098, %v1097
        %v1204 = vpack.c.b16 %v1100, %v1099
        %v1205 = vpack.c.b16 %v1102, %v1101
        %v1206 = vpack.c.b16 %v1104, %v1103
        %v1207 = vpack.c.b16 %v1106, %v1105
        %v1208 = vpack.c.b16 %v1108, %v1107
        %v1209 = vpack.c.b16 %v1110, %v1109
        %v1210 = vpack.c.b16 %v1112, %v1111
        %v1211 = vpack.c.b16 %v1114, %v1113
        %v1212 = vpack.c.b16 %v1116, %v1115
        %v1213 = vpack.c.b16 %v1118, %v1117
        %v1214 = vpack.c.b16 %v1120, %v1119
        %v1215 = vpack.c.b16 %v1122, %v1121
        %v1216 = vpack.c.b16 %v1124, %v1123
        %v1217 = vpack.c.b16 %v1126, %v1125
        %v1218 = vpack.c.b16 %v1128, %v1127
        %v1219 = vpack.c.b16 %v1130, %v1129
        %v1220 = vpack.c.b16 %v1132, %v1131
        %v1221 = vpack.c.b16 %v1134, %v1133
        %v1222 = vpack.c.b16 %v1136, %v1135
        %v1223 = vpack.c.b16 %v1138, %v1137
        %v1224 = vpack.c.b16 %v1140, %v1139
        %v1225 = vpack.c.b16 %v1142, %v1141
        %v1226 = vpack.c.b16 %v1144, %v1143
        %v1227 = vpack.c.b16 %v1146, %v1145
        %v1228 = vpack.c.b16 %v1148, %v1147
        %v1229 = vpack.c.b16 %v1150, %v1149
        %v1230 = vpack.c.b16 %v1152, %v1151
        %v1231 = vpack.c.b16 %v1154, %v1153
        %v1232 = vpack.c.b16 %v1156, %v1155
        %v1233 = vpack.c.b16 %v1158, %v1157
        %v1234 = vpack.c.b16 %v1160, %v1159
        %v1235 = vpack.c.b16 %v1162, %v1161
        %v1236 = vpack.c.b16 %v1164, %v1163
        %1309 = vmatpush.bf16.msra.mxu0 %v1172
        %1310 = vmatpush.bf16.msra.mxu0 %v1171
        %1311 = vmatpush.bf16.msra.mxu0 %v1170
        %1312 = vmatpush.bf16.msra.mxu0 %v1169
        %1313 = vmatpush.bf16.msra.mxu0 %v1168
        %1314 = vmatpush.bf16.msra.mxu0 %v1167
        %1315 = vmatpush.bf16.msra.mxu0 %v1166
        %1316 = vmatpush.bf16.msra.mxu0 %v1165
        %1317 = vmatmul.bf16.gmra.mxu0 %v733
        %v1318 = vpop.f32.mrf.mxu0
        %v1319 = vadd.f32 %v507, %v1318
        %v1320 = vpop.f32.mrf.mxu0
        %v1321 = vadd.f32 %v507, %v1320
        %1322 = vmatmul.bf16.gmra.mxu0 %v742
        %v1323 = vpop.f32.mrf.mxu0
        %v1324 = vadd.f32 %v507, %v1323
        %v1325 = vpop.f32.mrf.mxu0
        %v1326 = vadd.f32 %v507, %v1325
        %1327 = vmatmul.bf16.gmra.mxu0 %v751
        %v1328 = vpop.f32.mrf.mxu0
        %v1329 = vadd.f32 %v507, %v1328
        %v1330 = vpop.f32.mrf.mxu0
        %v1331 = vadd.f32 %v507, %v1330
        %1332 = vmatmul.bf16.gmra.mxu0 %v760
        %v1333 = vpop.f32.mrf.mxu0
        %v1334 = vadd.f32 %v507, %v1333
        %v1335 = vpop.f32.mrf.mxu0
        %v1336 = vadd.f32 %v507, %v1335
        %1337 = vmatmul.bf16.gmra.mxu0 %v769
        %v1338 = vpop.f32.mrf.mxu0
        %v1339 = vadd.f32 %v507, %v1338
        %v1340 = vpop.f32.mrf.mxu0
        %v1341 = vadd.f32 %v507, %v1340
        %1342 = vmatmul.bf16.gmra.mxu0 %v778
        %v1343 = vpop.f32.mrf.mxu0
        %v1344 = vadd.f32 %v507, %v1343
        %v1345 = vpop.f32.mrf.mxu0
        %v1346 = vadd.f32 %v507, %v1345
        %1347 = vmatmul.bf16.gmra.mxu0 %v787
        %v1348 = vpop.f32.mrf.mxu0
        %v1349 = vadd.f32 %v507, %v1348
        %v1350 = vpop.f32.mrf.mxu0
        %v1351 = vadd.f32 %v507, %v1350
        %1352 = vmatmul.bf16.gmra.mxu0 %v796
        %v1353 = vpop.f32.mrf.mxu0
        %v1354 = vadd.f32 %v507, %v1353
        %v1355 = vpop.f32.mrf.mxu0
        %v1356 = vadd.f32 %v507, %v1355
        %1357 = vdwg.mxu0
        %1358 = vmatpush.bf16.msra.mxu0 %v1180
        %1359 = vmatpush.bf16.msra.mxu0 %v1179
        %1360 = vmatpush.bf16.msra.mxu0 %v1178
        %1361 = vmatpush.bf16.msra.mxu0 %v1177
        %1362 = vmatpush.bf16.msra.mxu0 %v1176
        %1363 = vmatpush.bf16.msra.mxu0 %v1175
        %1364 = vmatpush.bf16.msra.mxu0 %v1174
        %1365 = vmatpush.bf16.msra.mxu0 %v1173
        %1366 = vmatmul.bf16.gmra.mxu0 %v734
        %v1367 = vpop.f32.mrf.mxu0
        %v1368 = vadd.f32 %v1319, %v1367
        %v1369 = vpop.f32.mrf.mxu0
        %v1370 = vadd.f32 %v1321, %v1369
        %1371 = vmatmul.bf16.gmra.mxu0 %v743
        %v1372 = vpop.f32.mrf.mxu0
        %v1373 = vadd.f32 %v1324, %v1372
        %v1374 = vpop.f32.mrf.mxu0
        %v1375 = vadd.f32 %v1326, %v1374
        %1376 = vmatmul.bf16.gmra.mxu0 %v752
        %v1377 = vpop.f32.mrf.mxu0
        %v1378 = vadd.f32 %v1329, %v1377
        %v1379 = vpop.f32.mrf.mxu0
        %v1380 = vadd.f32 %v1331, %v1379
        %1381 = vmatmul.bf16.gmra.mxu0 %v761
        %v1382 = vpop.f32.mrf.mxu0
        %v1383 = vadd.f32 %v1334, %v1382
        %v1384 = vpop.f32.mrf.mxu0
        %v1385 = vadd.f32 %v1336, %v1384
        %1386 = vmatmul.bf16.gmra.mxu0 %v770
        %v1387 = vpop.f32.mrf.mxu0
        %v1388 = vadd.f32 %v1339, %v1387
        %v1389 = vpop.f32.mrf.mxu0
        %v1390 = vadd.f32 %v1341, %v1389
        %1391 = vmatmul.bf16.gmra.mxu0 %v779
        %v1392 = vpop.f32.mrf.mxu0
        %v1393 = vadd.f32 %v1344, %v1392
        %v1394 = vpop.f32.mrf.mxu0
        %v1395 = vadd.f32 %v1346, %v1394
        %1396 = vmatmul.bf16.gmra.mxu0 %v788
        %v1397 = vpop.f32.mrf.mxu0
        %v1398 = vadd.f32 %v1349, %v1397
        %v1399 = vpop.f32.mrf.mxu0
        %v1400 = vadd.f32 %v1351, %v1399
        %1401 = vmatmul.bf16.gmra.mxu0 %v797
        %v1402 = vpop.f32.mrf.mxu0
        %v1403 = vadd.f32 %v1354, %v1402
        %v1404 = vpop.f32.mrf.mxu0
        %v1405 = vadd.f32 %v1356, %v1404
        %1406 = vdwg.mxu0
        %1407 = vmatpush.bf16.msra.mxu0 %v1188
        %1408 = vmatpush.bf16.msra.mxu0 %v1187
        %1409 = vmatpush.bf16.msra.mxu0 %v1186
        %1410 = vmatpush.bf16.msra.mxu0 %v1185
        %1411 = vmatpush.bf16.msra.mxu0 %v1184
        %1412 = vmatpush.bf16.msra.mxu0 %v1183
        %1413 = vmatpush.bf16.msra.mxu0 %v1182
        %1414 = vmatpush.bf16.msra.mxu0 %v1181
        %1415 = vmatmul.bf16.gmra.mxu0 %v735
        %v1416 = vpop.f32.mrf.mxu0
        %v1417 = vadd.f32 %v1368, %v1416
        %v1418 = vpop.f32.mrf.mxu0
        %v1419 = vadd.f32 %v1370, %v1418
        %1420 = vmatmul.bf16.gmra.mxu0 %v744
        %v1421 = vpop.f32.mrf.mxu0
        %v1422 = vadd.f32 %v1373, %v1421
        %v1423 = vpop.f32.mrf.mxu0
        %v1424 = vadd.f32 %v1375, %v1423
        %1425 = vmatmul.bf16.gmra.mxu0 %v753
        %v1426 = vpop.f32.mrf.mxu0
        %v1427 = vadd.f32 %v1378, %v1426
        %v1428 = vpop.f32.mrf.mxu0
        %v1429 = vadd.f32 %v1380, %v1428
        %1430 = vmatmul.bf16.gmra.mxu0 %v762
        %v1431 = vpop.f32.mrf.mxu0
        %v1432 = vadd.f32 %v1383, %v1431
        %v1433 = vpop.f32.mrf.mxu0
        %v1434 = vadd.f32 %v1385, %v1433
        %1435 = vmatmul.bf16.gmra.mxu0 %v771
        %v1436 = vpop.f32.mrf.mxu0
        %v1437 = vadd.f32 %v1388, %v1436
        %v1438 = vpop.f32.mrf.mxu0
        %v1439 = vadd.f32 %v1390, %v1438
        %1440 = vmatmul.bf16.gmra.mxu0 %v780
        %v1441 = vpop.f32.mrf.mxu0
        %v1442 = vadd.f32 %v1393, %v1441
        %v1443 = vpop.f32.mrf.mxu0
        %v1444 = vadd.f32 %v1395, %v1443
        %1445 = vmatmul.bf16.gmra.mxu0 %v789
        %v1446 = vpop.f32.mrf.mxu0
        %v1447 = vadd.f32 %v1398, %v1446
        %v1448 = vpop.f32.mrf.mxu0
        %v1449 = vadd.f32 %v1400, %v1448
        %1450 = vmatmul.bf16.gmra.mxu0 %v798
        %v1451 = vpop.f32.mrf.mxu0
        %v1452 = vadd.f32 %v1403, %v1451
        %v1453 = vpop.f32.mrf.mxu0
        %v1454 = vadd.f32 %v1405, %v1453
        %1455 = vdwg.mxu0
        %1456 = vmatpush.bf16.msra.mxu0 %v1196
        %1457 = vmatpush.bf16.msra.mxu0 %v1195
        %1458 = vmatpush.bf16.msra.mxu0 %v1194
        %1459 = vmatpush.bf16.msra.mxu0 %v1193
        %1460 = vmatpush.bf16.msra.mxu0 %v1192
        %1461 = vmatpush.bf16.msra.mxu0 %v1191
        %1462 = vmatpush.bf16.msra.mxu0 %v1190
        %1463 = vmatpush.bf16.msra.mxu0 %v1189
        %1464 = vmatmul.bf16.gmra.mxu0 %v736
        %v1465 = vpop.f32.mrf.mxu0
        %v1466 = vadd.f32 %v1417, %v1465
        %v1467 = vpop.f32.mrf.mxu0
        %v1468 = vadd.f32 %v1419, %v1467
        %1469 = vmatmul.bf16.gmra.mxu0 %v745
        %v1470 = vpop.f32.mrf.mxu0
        %v1471 = vadd.f32 %v1422, %v1470
        %v1472 = vpop.f32.mrf.mxu0
        %v1473 = vadd.f32 %v1424, %v1472
        %1474 = vmatmul.bf16.gmra.mxu0 %v754
        %v1475 = vpop.f32.mrf.mxu0
        %v1476 = vadd.f32 %v1427, %v1475
        %v1477 = vpop.f32.mrf.mxu0
        %v1478 = vadd.f32 %v1429, %v1477
        %1479 = vmatmul.bf16.gmra.mxu0 %v763
        %v1480 = vpop.f32.mrf.mxu0
        %v1481 = vadd.f32 %v1432, %v1480
        %v1482 = vpop.f32.mrf.mxu0
        %v1483 = vadd.f32 %v1434, %v1482
        %1484 = vmatmul.bf16.gmra.mxu0 %v772
        %v1485 = vpop.f32.mrf.mxu0
        %v1486 = vadd.f32 %v1437, %v1485
        %v1487 = vpop.f32.mrf.mxu0
        %v1488 = vadd.f32 %v1439, %v1487
        %1489 = vmatmul.bf16.gmra.mxu0 %v781
        %v1490 = vpop.f32.mrf.mxu0
        %v1491 = vadd.f32 %v1442, %v1490
        %v1492 = vpop.f32.mrf.mxu0
        %v1493 = vadd.f32 %v1444, %v1492
        %1494 = vmatmul.bf16.gmra.mxu0 %v790
        %v1495 = vpop.f32.mrf.mxu0
        %v1496 = vadd.f32 %v1447, %v1495
        %v1497 = vpop.f32.mrf.mxu0
        %v1498 = vadd.f32 %v1449, %v1497
        %1499 = vmatmul.bf16.gmra.mxu0 %v799
        %v1500 = vpop.f32.mrf.mxu0
        %v1501 = vadd.f32 %v1452, %v1500
        %v1502 = vpop.f32.mrf.mxu0
        %v1503 = vadd.f32 %v1454, %v1502
        %1504 = vdwg.mxu0
        %1505 = vmatpush.bf16.msra.mxu0 %v1204
        %1506 = vmatpush.bf16.msra.mxu0 %v1203
        %1507 = vmatpush.bf16.msra.mxu0 %v1202
        %1508 = vmatpush.bf16.msra.mxu0 %v1201
        %1509 = vmatpush.bf16.msra.mxu0 %v1200
        %1510 = vmatpush.bf16.msra.mxu0 %v1199
        %1511 = vmatpush.bf16.msra.mxu0 %v1198
        %1512 = vmatpush.bf16.msra.mxu0 %v1197
        %1513 = vmatmul.bf16.gmra.mxu0 %v737
        %v1514 = vpop.f32.mrf.mxu0
        %v1515 = vadd.f32 %v1466, %v1514
        %v1516 = vpop.f32.mrf.mxu0
        %v1517 = vadd.f32 %v1468, %v1516
        %1518 = vmatmul.bf16.gmra.mxu0 %v746
        %v1519 = vpop.f32.mrf.mxu0
        %v1520 = vadd.f32 %v1471, %v1519
        %v1521 = vpop.f32.mrf.mxu0
        %v1522 = vadd.f32 %v1473, %v1521
        %1523 = vmatmul.bf16.gmra.mxu0 %v755
        %v1524 = vpop.f32.mrf.mxu0
        %v1525 = vadd.f32 %v1476, %v1524
        %v1526 = vpop.f32.mrf.mxu0
        %v1527 = vadd.f32 %v1478, %v1526
        %1528 = vmatmul.bf16.gmra.mxu0 %v764
        %v1529 = vpop.f32.mrf.mxu0
        %v1530 = vadd.f32 %v1481, %v1529
        %v1531 = vpop.f32.mrf.mxu0
        %v1532 = vadd.f32 %v1483, %v1531
        %1533 = vmatmul.bf16.gmra.mxu0 %v773
        %v1534 = vpop.f32.mrf.mxu0
        %v1535 = vadd.f32 %v1486, %v1534
        %v1536 = vpop.f32.mrf.mxu0
        %v1537 = vadd.f32 %v1488, %v1536
        %1538 = vmatmul.bf16.gmra.mxu0 %v782
        %v1539 = vpop.f32.mrf.mxu0
        %v1540 = vadd.f32 %v1491, %v1539
        %v1541 = vpop.f32.mrf.mxu0
        %v1542 = vadd.f32 %v1493, %v1541
        %1543 = vmatmul.bf16.gmra.mxu0 %v791
        %v1544 = vpop.f32.mrf.mxu0
        %v1545 = vadd.f32 %v1496, %v1544
        %v1546 = vpop.f32.mrf.mxu0
        %v1547 = vadd.f32 %v1498, %v1546
        %1548 = vmatmul.bf16.gmra.mxu0 %v800
        %v1549 = vpop.f32.mrf.mxu0
        %v1550 = vadd.f32 %v1501, %v1549
        %v1551 = vpop.f32.mrf.mxu0
        %v1552 = vadd.f32 %v1503, %v1551
        %1553 = vdwg.mxu0
        %1554 = vmatpush.bf16.msra.mxu0 %v1212
        %1555 = vmatpush.bf16.msra.mxu0 %v1211
        %1556 = vmatpush.bf16.msra.mxu0 %v1210
        %1557 = vmatpush.bf16.msra.mxu0 %v1209
        %1558 = vmatpush.bf16.msra.mxu0 %v1208
        %1559 = vmatpush.bf16.msra.mxu0 %v1207
        %1560 = vmatpush.bf16.msra.mxu0 %v1206
        %1561 = vmatpush.bf16.msra.mxu0 %v1205
        %1562 = vmatmul.bf16.gmra.mxu0 %v738
        %v1563 = vpop.f32.mrf.mxu0
        %v1564 = vadd.f32 %v1515, %v1563
        %v1565 = vpop.f32.mrf.mxu0
        %v1566 = vadd.f32 %v1517, %v1565
        %1567 = vmatmul.bf16.gmra.mxu0 %v747
        %v1568 = vpop.f32.mrf.mxu0
        %v1569 = vadd.f32 %v1520, %v1568
        %v1570 = vpop.f32.mrf.mxu0
        %v1571 = vadd.f32 %v1522, %v1570
        %1572 = vmatmul.bf16.gmra.mxu0 %v756
        %v1573 = vpop.f32.mrf.mxu0
        %v1574 = vadd.f32 %v1525, %v1573
        %v1575 = vpop.f32.mrf.mxu0
        %v1576 = vadd.f32 %v1527, %v1575
        %1577 = vmatmul.bf16.gmra.mxu0 %v765
        %v1578 = vpop.f32.mrf.mxu0
        %v1579 = vadd.f32 %v1530, %v1578
        %v1580 = vpop.f32.mrf.mxu0
        %v1581 = vadd.f32 %v1532, %v1580
        %1582 = vmatmul.bf16.gmra.mxu0 %v774
        %v1583 = vpop.f32.mrf.mxu0
        %v1584 = vadd.f32 %v1535, %v1583
        %v1585 = vpop.f32.mrf.mxu0
        %v1586 = vadd.f32 %v1537, %v1585
        %1587 = vmatmul.bf16.gmra.mxu0 %v783
        %v1588 = vpop.f32.mrf.mxu0
        %v1589 = vadd.f32 %v1540, %v1588
        %v1590 = vpop.f32.mrf.mxu0
        %v1591 = vadd.f32 %v1542, %v1590
        %1592 = vmatmul.bf16.gmra.mxu0 %v792
        %v1593 = vpop.f32.mrf.mxu0
        %v1594 = vadd.f32 %v1545, %v1593
        %v1595 = vpop.f32.mrf.mxu0
        %v1596 = vadd.f32 %v1547, %v1595
        %1597 = vmatmul.bf16.gmra.mxu0 %v801
        %v1598 = vpop.f32.mrf.mxu0
        %v1599 = vadd.f32 %v1550, %v1598
        %v1600 = vpop.f32.mrf.mxu0
        %v1601 = vadd.f32 %v1552, %v1600
        %1602 = vdwg.mxu0
        %1603 = vmatpush.bf16.msra.mxu0 %v1220
        %1604 = vmatpush.bf16.msra.mxu0 %v1219
        %1605 = vmatpush.bf16.msra.mxu0 %v1218
        %1606 = vmatpush.bf16.msra.mxu0 %v1217
        %1607 = vmatpush.bf16.msra.mxu0 %v1216
        %1608 = vmatpush.bf16.msra.mxu0 %v1215
        %1609 = vmatpush.bf16.msra.mxu0 %v1214
        %1610 = vmatpush.bf16.msra.mxu0 %v1213
        %1611 = vmatmul.bf16.gmra.mxu0 %v739
        %v1612 = vpop.f32.mrf.mxu0
        %v1613 = vadd.f32 %v1564, %v1612
        %v1614 = vpop.f32.mrf.mxu0
        %v1615 = vadd.f32 %v1566, %v1614
        %1616 = vmatmul.bf16.gmra.mxu0 %v748
        %v1617 = vpop.f32.mrf.mxu0
        %v1618 = vadd.f32 %v1569, %v1617
        %v1619 = vpop.f32.mrf.mxu0
        %v1620 = vadd.f32 %v1571, %v1619
        %1621 = vmatmul.bf16.gmra.mxu0 %v757
        %v1622 = vpop.f32.mrf.mxu0
        %v1623 = vadd.f32 %v1574, %v1622
        %v1624 = vpop.f32.mrf.mxu0
        %v1625 = vadd.f32 %v1576, %v1624
        %1626 = vmatmul.bf16.gmra.mxu0 %v766
        %v1627 = vpop.f32.mrf.mxu0
        %v1628 = vadd.f32 %v1579, %v1627
        %v1629 = vpop.f32.mrf.mxu0
        %v1630 = vadd.f32 %v1581, %v1629
        %1631 = vmatmul.bf16.gmra.mxu0 %v775
        %v1632 = vpop.f32.mrf.mxu0
        %v1633 = vadd.f32 %v1584, %v1632
        %v1634 = vpop.f32.mrf.mxu0
        %v1635 = vadd.f32 %v1586, %v1634
        %1636 = vmatmul.bf16.gmra.mxu0 %v784
        %v1637 = vpop.f32.mrf.mxu0
        %v1638 = vadd.f32 %v1589, %v1637
        %v1639 = vpop.f32.mrf.mxu0
        %v1640 = vadd.f32 %v1591, %v1639
        %1641 = vmatmul.bf16.gmra.mxu0 %v793
        %v1642 = vpop.f32.mrf.mxu0
        %v1643 = vadd.f32 %v1594, %v1642
        %v1644 = vpop.f32.mrf.mxu0
        %v1645 = vadd.f32 %v1596, %v1644
        %1646 = vmatmul.bf16.gmra.mxu0 %v802
        %v1647 = vpop.f32.mrf.mxu0
        %v1648 = vadd.f32 %v1599, %v1647
        %v1649 = vpop.f32.mrf.mxu0
        %v1650 = vadd.f32 %v1601, %v1649
        %1651 = vdwg.mxu0
        %1652 = vmatpush.bf16.msra.mxu0 %v1228
        %1653 = vmatpush.bf16.msra.mxu0 %v1227
        %1654 = vmatpush.bf16.msra.mxu0 %v1226
        %1655 = vmatpush.bf16.msra.mxu0 %v1225
        %1656 = vmatpush.bf16.msra.mxu0 %v1224
        %1657 = vmatpush.bf16.msra.mxu0 %v1223
        %1658 = vmatpush.bf16.msra.mxu0 %v1222
        %1659 = vmatpush.bf16.msra.mxu0 %v1221
        %1660 = vmatmul.bf16.gmra.mxu0 %v740
        %v1661 = vpop.f32.mrf.mxu0
        %v1662 = vadd.f32 %v1613, %v1661
        %v1663 = vpop.f32.mrf.mxu0
        %v1664 = vadd.f32 %v1615, %v1663
        %1665 = vmatmul.bf16.gmra.mxu0 %v749
        %v1666 = vpop.f32.mrf.mxu0
        %v1667 = vadd.f32 %v1618, %v1666
        %v1668 = vpop.f32.mrf.mxu0
        %v1669 = vadd.f32 %v1620, %v1668
        %1670 = vmatmul.bf16.gmra.mxu0 %v758
        %v1671 = vpop.f32.mrf.mxu0
        %v1672 = vadd.f32 %v1623, %v1671
        %v1673 = vpop.f32.mrf.mxu0
        %v1674 = vadd.f32 %v1625, %v1673
        %1675 = vmatmul.bf16.gmra.mxu0 %v767
        %v1676 = vpop.f32.mrf.mxu0
        %v1677 = vadd.f32 %v1628, %v1676
        %v1678 = vpop.f32.mrf.mxu0
        %v1679 = vadd.f32 %v1630, %v1678
        %1680 = vmatmul.bf16.gmra.mxu0 %v776
        %v1681 = vpop.f32.mrf.mxu0
        %v1682 = vadd.f32 %v1633, %v1681
        %v1683 = vpop.f32.mrf.mxu0
        %v1684 = vadd.f32 %v1635, %v1683
        %1685 = vmatmul.bf16.gmra.mxu0 %v785
        %v1686 = vpop.f32.mrf.mxu0
        %v1687 = vadd.f32 %v1638, %v1686
        %v1688 = vpop.f32.mrf.mxu0
        %v1689 = vadd.f32 %v1640, %v1688
        %1690 = vmatmul.bf16.gmra.mxu0 %v794
        %v1691 = vpop.f32.mrf.mxu0
        %v1692 = vadd.f32 %v1643, %v1691
        %v1693 = vpop.f32.mrf.mxu0
        %v1694 = vadd.f32 %v1645, %v1693
        %1695 = vmatmul.bf16.gmra.mxu0 %v803
        %v1696 = vpop.f32.mrf.mxu0
        %v1697 = vadd.f32 %v1648, %v1696
        %v1698 = vpop.f32.mrf.mxu0
        %v1699 = vadd.f32 %v1650, %v1698
        %1700 = vdwg.mxu0
        %1701 = vmatpush.bf16.msra.mxu0 %v1236
        %1702 = vmatpush.bf16.msra.mxu0 %v1235
        %1703 = vmatpush.bf16.msra.mxu0 %v1234
        %1704 = vmatpush.bf16.msra.mxu0 %v1233
        %1705 = vmatpush.bf16.msra.mxu0 %v1232
        %1706 = vmatpush.bf16.msra.mxu0 %v1231
        %1707 = vmatpush.bf16.msra.mxu0 %v1230
        %1708 = vmatpush.bf16.msra.mxu0 %v1229
        %1709 = vmatmul.bf16.gmra.mxu0 %v741
        %v1710 = vpop.f32.mrf.mxu0
        %v1711 = vadd.f32 %v1662, %v1710
        %v1712 = vpop.f32.mrf.mxu0
        %v1713 = vadd.f32 %v1664, %v1712
        %1714 = vmatmul.bf16.gmra.mxu0 %v750
        %v1715 = vpop.f32.mrf.mxu0
        %v1716 = vadd.f32 %v1667, %v1715
        %v1717 = vpop.f32.mrf.mxu0
        %v1718 = vadd.f32 %v1669, %v1717
        %1719 = vmatmul.bf16.gmra.mxu0 %v759
        %v1720 = vpop.f32.mrf.mxu0
        %v1721 = vadd.f32 %v1672, %v1720
        %v1722 = vpop.f32.mrf.mxu0
        %v1723 = vadd.f32 %v1674, %v1722
        %1724 = vmatmul.bf16.gmra.mxu0 %v768
        %v1725 = vpop.f32.mrf.mxu0
        %v1726 = vadd.f32 %v1677, %v1725
        %v1727 = vpop.f32.mrf.mxu0
        %v1728 = vadd.f32 %v1679, %v1727
        %1729 = vmatmul.bf16.gmra.mxu0 %v777
        %v1730 = vpop.f32.mrf.mxu0
        %v1731 = vadd.f32 %v1682, %v1730
        %v1732 = vpop.f32.mrf.mxu0
        %v1733 = vadd.f32 %v1684, %v1732
        %1734 = vmatmul.bf16.gmra.mxu0 %v786
        %v1735 = vpop.f32.mrf.mxu0
        %v1736 = vadd.f32 %v1687, %v1735
        %v1737 = vpop.f32.mrf.mxu0
        %v1738 = vadd.f32 %v1689, %v1737
        %1739 = vmatmul.bf16.gmra.mxu0 %v795
        %v1740 = vpop.f32.mrf.mxu0
        %v1741 = vadd.f32 %v1692, %v1740
        %v1742 = vpop.f32.mrf.mxu0
        %v1743 = vadd.f32 %v1694, %v1742
        %1744 = vmatmul.bf16.gmra.mxu0 %v804
        %v1745 = vpop.f32.mrf.mxu0
        %v1746 = vadd.f32 %v1697, %v1745
        %v1747 = vpop.f32.mrf.mxu0
        %v1748 = vadd.f32 %v1699, %v1747
        %1749 = vdwg.mxu0
        %v1750 = vmax.f32 %v1711, 0.0
        %v1751 = vmax.f32 %v1713, 0.0
        %v1752 = vmax.f32 %v1716, 0.0
        %v1753 = vmax.f32 %v1718, 0.0
        %v1754 = vmax.f32 %v1721, 0.0
        %v1755 = vmax.f32 %v1723, 0.0
        %v1756 = vmax.f32 %v1726, 0.0
        %v1757 = vmax.f32 %v1728, 0.0
        %v1758 = vmax.f32 %v1731, 0.0
        %v1759 = vmax.f32 %v1733, 0.0
        %v1760 = vmax.f32 %v1736, 0.0
        %v1761 = vmax.f32 %v1738, 0.0
        %v1762 = vmax.f32 %v1741, 0.0
        %v1763 = vmax.f32 %v1743, 0.0
        %v1764 = vmax.f32 %v1746, 0.0
        %v1765 = vmax.f32 %v1748, 0.0
        %v1766 = vpack.c.bf16 %v1751, %v1750
        %v1767 = vpack.c.bf16 %v1753, %v1752
        %v1768 = vpack.c.bf16 %v1755, %v1754
        %v1769 = vpack.c.bf16 %v1757, %v1756
        %v1770 = vpack.c.bf16 %v1759, %v1758
        %v1771 = vpack.c.bf16 %v1761, %v1760
        %v1772 = vpack.c.bf16 %v1763, %v1762
        %v1773 = vpack.c.bf16 %v1765, %v1764
        %v1774 = vld [vmem:[#allocation7] sm:$0xf]
        %v1775 = vld [vmem:[#allocation7 + $0x4] sm:$0xf]
        %v1776 = vld [vmem:[#allocation7 + $0x8] sm:$0xf]
        %v1777 = vld [vmem:[#allocation7 + $0xc] sm:$0xf]
        %v1778 = vld [vmem:[#allocation7 + $0x10] sm:$0xf]
        %v1779 = vld [vmem:[#allocation7 + $0x14] sm:$0xf]
        %v1780 = vld [vmem:[#allocation7 + $0x18] sm:$0xf]
        %v1781 = vld [vmem:[#allocation7 + $0x1c] sm:$0xf]
        %v1782 = vld [vmem:[#allocation7 + $0x20] sm:$0xf]
        %v1783 = vld [vmem:[#allocation7 + $0x24] sm:$0xf]
        %v1784 = vld [vmem:[#allocation7 + $0x28] sm:$0xf]
        %v1785 = vld [vmem:[#allocation7 + $0x2c] sm:$0xf]
        %v1786 = vld [vmem:[#allocation7 + $0x30] sm:$0xf]
        %v1787 = vld [vmem:[#allocation7 + $0x34] sm:$0xf]
        %v1788 = vld [vmem:[#allocation7 + $0x38] sm:$0xf]
        %v1789 = vld [vmem:[#allocation7 + $0x3c] sm:$0xf]
        %v1790 = vld [vmem:[%s4] sm:$0x1]
        %v1792 = vperm.slane %v1790, 0
        %v1810 = vunpack.c.l.b16 %v1774
        %v1811 = vunpack.c.l.b16 %v1775
        %v1812 = vunpack.c.l.b16 %v1776
        %v1813 = vunpack.c.l.b16 %v1777
        %v1814 = vunpack.c.l.b16 %v1778
        %v1815 = vunpack.c.l.b16 %v1779
        %v1816 = vunpack.c.l.b16 %v1780
        %v1817 = vunpack.c.l.b16 %v1781
        %v1818 = vunpack.c.l.b16 %v1782
        %v1819 = vunpack.c.l.b16 %v1783
        %v1820 = vunpack.c.l.b16 %v1784
        %v1821 = vunpack.c.l.b16 %v1785
        %v1822 = vunpack.c.l.b16 %v1786
        %v1823 = vunpack.c.l.b16 %v1787
        %v1824 = vunpack.c.l.b16 %v1788
        %v1825 = vunpack.c.l.b16 %v1789
        %v1826 = vpack.c.b16 %v1811, %v1810
        %v1827 = vpack.c.b16 %v1813, %v1812
        %v1828 = vpack.c.b16 %v1815, %v1814
        %v1829 = vpack.c.b16 %v1817, %v1816
        %v1830 = vpack.c.b16 %v1819, %v1818
        %v1831 = vpack.c.b16 %v1821, %v1820
        %v1832 = vpack.c.b16 %v1823, %v1822
        %v1833 = vpack.c.b16 %v1825, %v1824
        %1842 = vmatpush.bf16.msra.mxu0 %v1833
        %1843 = vmatpush.bf16.msra.mxu0 %v1832
        %1844 = vmatpush.bf16.msra.mxu0 %v1831
        %1845 = vmatpush.bf16.msra.mxu0 %v1830
        %1846 = vmatpush.bf16.msra.mxu0 %v1829
        %1847 = vmatpush.bf16.msra.mxu0 %v1828
        %1848 = vmatpush.bf16.msra.mxu0 %v1827
        %1849 = vmatpush.bf16.msra.mxu0 %v1826
        %1850 = vmatmul.bf16.gmra.mxu0 %v1766
        %v1851 = vpop.f32.mrf.mxu0
        %v1852 = vadd.f32 %v1792, %v1851
        %v1853 = vpop.f32.mrf.mxu0
        %v1854 = vadd.f32 %v1792, %v1853
        %1855 = vmatmul.bf16.gmra.mxu0 %v1767
        %v1856 = vpop.f32.mrf.mxu0
        %v1857 = vadd.f32 %v1792, %v1856
        %v1858 = vpop.f32.mrf.mxu0
        %v1859 = vadd.f32 %v1792, %v1858
        %1860 = vmatmul.bf16.gmra.mxu0 %v1768
        %v1861 = vpop.f32.mrf.mxu0
        %v1862 = vadd.f32 %v1792, %v1861
        %v1863 = vpop.f32.mrf.mxu0
        %v1864 = vadd.f32 %v1792, %v1863
        %1865 = vmatmul.bf16.gmra.mxu0 %v1769
        %v1866 = vpop.f32.mrf.mxu0
        %v1867 = vadd.f32 %v1792, %v1866
        %v1868 = vpop.f32.mrf.mxu0
        %v1869 = vadd.f32 %v1792, %v1868
        %1870 = vmatmul.bf16.gmra.mxu0 %v1770
        %v1871 = vpop.f32.mrf.mxu0
        %v1872 = vadd.f32 %v1792, %v1871
        %v1873 = vpop.f32.mrf.mxu0
        %v1874 = vadd.f32 %v1792, %v1873
        %1875 = vmatmul.bf16.gmra.mxu0 %v1771
        %v1876 = vpop.f32.mrf.mxu0
        %v1877 = vadd.f32 %v1792, %v1876
        %v1878 = vpop.f32.mrf.mxu0
        %v1879 = vadd.f32 %v1792, %v1878
        %1880 = vmatmul.bf16.gmra.mxu0 %v1772
        %v1881 = vpop.f32.mrf.mxu0
        %v1882 = vadd.f32 %v1792, %v1881
        %v1883 = vpop.f32.mrf.mxu0
        %v1884 = vadd.f32 %v1792, %v1883
        %1885 = vmatmul.bf16.gmra.mxu0 %v1773
        %v1886 = vpop.f32.mrf.mxu0
        %v1887 = vadd.f32 %v1792, %v1886
        %v1888 = vpop.f32.mrf.mxu0
        %v1889 = vadd.f32 %v1792, %v1888
        %1890 = vdwg.mxu0
        %1891 = vst [vmem:[%s278] sm:$0xff] %v1852
        %1892 = vst [vmem:[%s278 + $0x8] sm:$0xff] %v1854
        %1893 = vst [vmem:[%s278 + $0x10] sm:$0xff] %v1857
        %1894 = vst [vmem:[%s278 + $0x18] sm:$0xff] %v1859
        %1895 = vst [vmem:[%s278 + $0x20] sm:$0xff] %v1862
        %1896 = vst [vmem:[%s278 + $0x28] sm:$0xff] %v1864
        %1897 = vst [vmem:[%s278 + $0x30] sm:$0xff] %v1867
        %1898 = vst [vmem:[%s278 + $0x38] sm:$0xff] %v1869
        %1899 = vst [vmem:[%s278 + $0x40] sm:$0xff] %v1872
        %1900 = vst [vmem:[%s278 + $0x48] sm:$0xff] %v1874
        %1901 = vst [vmem:[%s278 + $0x50] sm:$0xff] %v1877
        %1902 = vst [vmem:[%s278 + $0x58] sm:$0xff] %v1879
        %1903 = vst [vmem:[%s278 + $0x60] sm:$0xff] %v1882
        %1904 = vst [vmem:[%s278 + $0x68] sm:$0xff] %v1884
        %1905 = vst [vmem:[%s278 + $0x70] sm:$0xff] %v1887
        %1906 = vst [vmem:[%s278 + $0x78] sm:$0xff] %v1889
        %s1907 = sand.u32 %s141, 1
        %s1908 = scalar_lea.sflag [#allocation4], %s1907
        %s1909 = sand.u32 %s141, 1
        %s1910 = smul.addr %s1909, 128
        %s1911 = scalar_lea.vmem [#allocation8], %s1910
        // Predicated region
        $region53: #{tpu_custom_call.1} parent=39 // pred_check
          %p1912 = pneg %p151
        $region54: #{tpu_custom_call.1} parent=39 // pred_check_branch
          %1914 = sbr.rel (%p1912) target = $region56
        $region55: #{tpu_custom_call.1} parent=39 // pred_region
          %s1915 = smul.u32 16, %s23
          %1917 = vsyncadd %s1908, 0
          %s1918 = smul.addr %s1915, 8
          %s1919 = scalar_lea.hbm %s5, %s1918
          %s1920 = sshll.u32 %s1911, 4
          %s1921 = int_to_ptr.vmem [resolvable:$true] %s1920
          %s1922 = sshll.u32 %s1919, 4
          %s1923 = int_to_ptr.hbm [resolvable:$true] %s1922
          %1928 = dma.vmem_to_hbm [thread:$0]  %s1921, 2048, %s1923, %s1908, 128, 128, 8
        $region56: #{tpu_custom_call.1} parent=39 // pred_fallthru
          _
      $region40: #{tpu_custom_call.1} parent=5 // pred_fallthru
        _
      %p1929 = scmp.le.s32.totalorder 2, %s18
      // Predicated region
      $region57: #{tpu_custom_call.1} parent=5 // pred_check
        %p1930 = pneg %p1929
      $region58: #{tpu_custom_call.1} parent=5 // pred_check_branch
        %1932 = sbr.rel (%p1930) target = $region60
      $region59: #{tpu_custom_call.1} parent=5 // pred_region
        %s1933 = ssub.s32 %s18, 2
        // Predicated region
        $region61: #{tpu_custom_call.1} parent=59 // pred_check
          %p1934 = pneg %p157
        $region62: #{tpu_custom_call.1} parent=59 // pred_check_branch
          %1936 = sbr.rel (%p1934) target = $region64
        $region63: #{tpu_custom_call.1} parent=59 // pred_region
          %s1937 = sand.u32 %s142, 1
          %s1938 = scalar_lea.sflag [#allocation4], %s1937
          %s1939 = sand.u32 %s142, 1
          %s1940 = smul.addr %s1939, 128
          %s1941 = scalar_lea.vmem [#allocation8], %s1940
          %1943 = dma.done %s1938, 2048
        $region64: #{tpu_custom_call.1} parent=59 // pred_fallthru
          _
      $region60: #{tpu_custom_call.1} parent=5 // pred_fallthru
        _
    $region6: #{tpu_custom_call.1} parent=1 // loop_footer
      %s22 = sadd.s32 1, %s18
    $region7: #{tpu_custom_call.1} parent=1 // loop_footer_branch
      %17 = sbr.rel target = $region3
    $region8: #{tpu_custom_call.1} parent=1 // loop_exit
      _
    %1944 = vsyncpa [#allocation3], 1
    %s1945 = scalar_lea.sflag [#allocation3], 1
    %1946 = vsyncpa %s1945, 1
    %1947 = vsyncpa [#allocation6], 1
    %1948 = vsyncpa [#allocation4], 1
    %s1949 = scalar_lea.sflag [#allocation4], 1
    %1950 = vsyncpa %s1949, 1

</llo_original>
